<compile_context>
chip_gen: v7x
topology: tpu7x:2x2x1
jax: 0.10.0
libtpu: 0.0.40
codegen_flags: <defaults>
</compile_context>

<pallas_src>
import jax
import jax.numpy as jnp
import numpy as np
from jax.experimental import pallas as pl
from jax.experimental.pallas import tpu as pltpu

LEAKY_ALPHA = 0.01  # MAGNN_mptype_layer default alpha


# --------------------------------------------------------------------------- #
# Kernel 1: per-metapath-type layer (one metapath type per grid step).
#   RotatE0 rotation -> mean encoder -> fused (attn1|attn2) attention ->
#   leaky relu -> per-destination edge softmax -> single aggregation matmul.
# --------------------------------------------------------------------------- #
def mptype_kernel(x_ref, c1_ref, c2_ref, watt_ref, adj_ref, out_ref,
                  cat_ref, attn_ref):
    # x_ref   : (E, L*D)  metapath-instance features, per position packed [re|im]
    # c1_ref  : (1, L*D)  rotation real coeffs, duplicated over the two halves
    # c2_ref  : (1, L*D)  rotation imag coeffs, duplicated over the two halves
    # watt_ref: (2D, H)   fused [attn1 ; attn2] weights (packed layout)
    # adj_ref : (N, E)    one-hot destination matrix
    # out_ref : (N, H*D)  aggregated per-node features (packed layout, lane-dense)
    # cat_ref : (E, 2D)   scratch: [center | mean_feat]
    # attn_ref: (H*N, E)  scratch: stacked per-head normalized attention
    E, LD = x_ref.shape
    N = adj_ref.shape[0]
    TwoD, H = watt_ref.shape
    D = TwoD // 2
    Dh = D // 2
    L = LD // D

    # ---- RotatE rotation + mean over metapath positions (lane-dense) --------
    x = x_ref[...]                        # (E, L*D)
    z1 = x * c1_ref[...]                  # per block l: [x_re*r_re | x_im*r_re]
    z2 = x * c2_ref[...]                  # per block l: [x_re*r_im | x_im*r_im]
    s1 = z1[:, 0:D]
    s2 = z2[:, 0:D]
    for l in range(1, L):                 # static lane-slice adds (pure VPU)
        s1 = s1 + z1[:, l * D:(l + 1) * D]
        s2 = s2 + z2[:, l * D:(l + 1) * D]
    inv_l = jnp.float32(1.0 / L)
    m_re = (s1[:, :Dh] - s2[:, Dh:]) * inv_l        # (E, Dh)
    m_im = (s2[:, :Dh] + s1[:, Dh:]) * inv_l        # (E, Dh)

    # ---- assemble [center | mean] via lane-slice writes (no concatenate) ----
    cat_ref[:, 0:D] = x[:, (L - 1) * D:LD]          # center node feats (packed)
    cat_ref[:, D:D + Dh] = m_re
    cat_ref[:, D + Dh:TwoD] = m_im

    # ---- fused attention: a1 + a2 in a single MXU matmul (K = 2D) -----------
    a = jnp.dot(cat_ref[...], watt_ref[...],
                preferred_element_type=jnp.float32)  # (E, H)
    a = jnp.where(a >= 0, a, LEAKY_ALPHA * a)        # LeakyReLU

    # ---- per-destination edge softmax (mask hoisted out of the head loop) ---
    adj = adj_ref[...]                               # (N, E)
    mask = adj > 0
    neg_inf = jnp.float32(-jnp.inf)
    for h in range(H):                               # H is small & static
        a_h = a[:, h][None, :]                       # (1, E)
        masked = jnp.where(mask, a_h, neg_inf)       # (N, E)
        nmax = jnp.max(masked, axis=1, keepdims=True)            # (N, 1)
        p = jnp.where(mask, jnp.exp(a_h - nmax), 0.0)            # (N, E)
        den = jnp.sum(p, axis=1, keepdims=True)                  # (N, 1)
        # guard: destination with no incident instance -> all-zero attention
        attn_ref[h * N:(h + 1) * N, :] = p * jnp.where(den > 0, 1.0 / den, 0.0)

    # ---- one aggregation matmul for all heads --------------------------------
    mean_feat = cat_ref[:, D:TwoD]                                # (E, D)
    ft = jnp.dot(attn_ref[...], mean_feat,
                 preferred_element_type=jnp.float32)              # (H*N, D)
    for h in range(H):                               # lane-dense (N, H*D) write
        out_ref[:, h * D:(h + 1) * D] = ft[h * N:(h + 1) * N, :]


def run_mptype(edata_p, c1, c2, watt, adj):
    # edata_p: (M, E, L*D)   c1/c2: (M, 1, L*D)   watt: (M, 2D, H)   adj: (M, N, E)
    M, E, LD = edata_p.shape
    N = adj.shape[1]
    TwoD, H = watt.shape[1], watt.shape[2]
    D = TwoD // 2
    return pl.pallas_call(
        mptype_kernel,
        out_shape=jax.ShapeDtypeStruct((M, N, H * D), jnp.float32),
        grid=(M,),
        in_specs=[
            pl.BlockSpec((None, E, LD), lambda m: (m, 0, 0)),
            pl.BlockSpec((None, 1, LD), lambda m: (m, 0, 0)),
            pl.BlockSpec((None, 1, LD), lambda m: (m, 0, 0)),
            pl.BlockSpec((None, TwoD, H), lambda m: (m, 0, 0)),
            pl.BlockSpec((None, N, E), lambda m: (m, 0, 0)),
        ],
        out_specs=pl.BlockSpec((None, N, H * D), lambda m: (m, 0, 0)),
        scratch_shapes=[pltpu.VMEM((E, TwoD), jnp.float32),
                        pltpu.VMEM((H * N, E), jnp.float32)],
        compiler_params=pltpu.CompilerParams(
            dimension_semantics=("parallel",),
            vmem_limit_bytes=32 * 1024 * 1024),
    )(edata_p, c1, c2, watt, adj)


# --------------------------------------------------------------------------- #
# Kernel 2: MAGNN_ntype_layer inter-metapath attention (beta) + MAGNN_layer fc.
#   elu -> batched fc1/tanh -> per-metapath mean/fc2 -> softmax(beta)
#   -> weighted sum -> final fc -> elu        (packed feature layout throughout)
# --------------------------------------------------------------------------- #
def ntype_combine_kernel(feats_ref, fc1wt_ref, fc1b_ref, fc2w_ref,
                         fcwt_ref, fcb_ref, out_ref):
    # feats_ref: (M*Nt, HD)  per-mptype target features stacked (pre-ELU, packed)
    # fc1wt_ref: (HD, A), fc1b_ref: (1, A), fc2w_ref: (1, A)
    # fcwt_ref : (HD, O), fcb_ref : (1, O)
    # out_ref  : (Nt, O)
    MNt, HD = feats_ref.shape
    Nt = out_ref.shape[0]
    M = MNt // Nt

    x = feats_ref[...]
    # F.elu  (exp(x)-1 kept instead of expm1 for guaranteed Mosaic lowering)
    x = jnp.where(x > 0, x, jnp.exp(x) - 1.0)

    # one batched fc1 matmul across all metapath types
    h1 = jnp.tanh(jnp.dot(x, fc1wt_ref[...],
                          preferred_element_type=jnp.float32) + fc1b_ref[...])
    # fc2 has no bias -> fc2(mean(h1)) == mean(fc2(h1)); apply per row then mean
    s_row = jnp.sum(h1 * fc2w_ref[...], axis=1, keepdims=True)    # (M*Nt, 1)

    scores = [jnp.mean(s_row[m * Nt:(m + 1) * Nt], axis=0, keepdims=True)
              for m in range(M)]                                  # each (1, 1)
    smax = scores[0]
    for m in range(1, M):
        smax = jnp.maximum(smax, scores[m])
    exps = [jnp.exp(s - smax) for s in scores]
    den = exps[0]
    for m in range(1, M):
        den = den + exps[m]
    inv_den = 1.0 / den

    combined = (exps[0] * inv_den) * x[0:Nt]
    for m in range(1, M):
        combined = combined + (exps[m] * inv_den) * x[m * Nt:(m + 1) * Nt]

    y = jnp.dot(combined, fcwt_ref[...],
                preferred_element_type=jnp.float32) + fcb_ref[...]
    out_ref[...] = jnp.where(y > 0, y, jnp.exp(y) - 1.0)          # F.elu


def run_combine(feats2d, nt, fc1wt, fc1b, fc2w, fcwt, fcb):
    O = fcwt.shape[1]
    vmem = lambda: pl.BlockSpec(memory_space=pltpu.MemorySpace.VMEM)
    return pl.pallas_call(
        ntype_combine_kernel,
        out_shape=jax.ShapeDtypeStruct((nt, O), jnp.float32),
        in_specs=[vmem() for _ in range(6)],
        out_specs=vmem(),
        compiler_params=pltpu.CompilerParams(vmem_limit_bytes=32 * 1024 * 1024),
    )(feats2d, fc1wt, fc1b, fc2w, fcwt, fcb)


# --------------------------------------------------------------------------- #
# Glue helpers
# --------------------------------------------------------------------------- #
def compute_final_rvec(rvec_exp, etypes, Dh):
    # Backward cumulative complex rotation exactly as in the RotatE0 branch.
    L = len(etypes) + 1
    final = [None] * L
    final[L - 1] = jnp.stack(
        [jnp.ones((Dh,), jnp.float32), jnp.zeros((Dh,), jnp.float32)], axis=-1)
    for i in range(L - 2, -1, -1):
        nxt = final[i + 1]
        if etypes[i] is None:
            final[i] = nxt
        else:
            r = rvec_exp[etypes[i]]                       # (Dh, 2)
            re = nxt[:, 0] * r[:, 0] - nxt[:, 1] * r[:, 1]
            im = nxt[:, 0] * r[:, 1] + nxt[:, 1] * r[:, 0]
            final[i] = jnp.stack([re, im], axis=-1)
    final = jnp.stack(final, axis=0)                      # (L, Dh, 2)
    return jnp.concatenate([final[:, :, 0], final[:, :, 1]], axis=-1)  # (L, D)


# --------------------------------------------------------------------------- #
# Main: deterministic synthetic setup and full MAGNN_layer forward.
# --------------------------------------------------------------------------- #
if __name__ == "__main__":
    key = jax.random.PRNGKey(0)

    idim, odim, adim, nhead = 32, 16, 32, 2
    num_etype = 4
    D, H = idim, nhead
    Dh = D // 2

    # graph statistics: one node type, two metapath types (RotatE0 relations)
    ntype_mptype_etypes = {"A": {"APA": [0, 1], "AQA": [2, 3]}}
    mptypes = list(ntype_mptype_etypes["A"].keys())
    M = len(mptypes)

    NG = 20   # total nodes with input features (global ids 0..19)
    NT = 8    # target ("A"-type) nodes, global ids 0..7
    EPT = 3   # metapath instances per target node
    E = NT * EPT
    L = 3     # metapath length (len(etypes) + 1)

    keys = jax.random.split(key, 16)
    features = jax.random.normal(keys[0], (NG, D), dtype=jnp.float32)

    def xavier(k, shape, fan_in, fan_out, gain=1.414):
        std = gain * np.sqrt(2.0 / (fan_in + fan_out))
        return jax.random.normal(k, shape, dtype=jnp.float32) * jnp.float32(std)

    # parameters (shapes exactly as in the PyTorch module __init__s)
    rvec = xavier(keys[1], (num_etype // 2, Dh, 2), Dh, 2)         # RotatE0 rvec
    mp_params = {}
    for i, mp in enumerate(mptypes):
        mp_params[mp] = {
            "attn1": xavier(keys[2 + 2 * i], (H, D), D, H),        # Linear(odim, nhead)
            "attn2": xavier(keys[3 + 2 * i], (1, H, D), D, H),     # Parameter(1, H, D)
        }
    fc1_w = xavier(keys[8], (adim, D * H), D * H, adim)
    fc1_b = jnp.zeros((adim,), jnp.float32)
    fc2_w = xavier(keys[9], (1, adim), adim, 1)
    fc_w = xavier(keys[10], (odim, D * H), D * H, odim)
    fc_b = jnp.zeros((odim,), jnp.float32)

    # synthetic metapath instances: last node of each instance is its target node
    rng = np.random.RandomState(0)
    mptype_mpinstances, mptype_iftargets, mptype_adj = {}, {}, {}
    for mp in mptypes:
        mpinst = np.zeros((E, L), dtype=np.int32)
        mpinst[:, -1] = np.repeat(np.arange(NT), EPT)              # center / dst node
        mpinst[:, :-1] = rng.randint(NT, NG, size=(E, L - 1))
        mptype_mpinstances[mp] = mpinst
        mptype_iftargets[mp] = np.stack(
            [np.arange(NT, dtype=np.int64), np.ones(NT, dtype=np.int64)], axis=1)
        mptype_adj[mp] = jnp.asarray(
            (np.arange(NT)[:, None] == mpinst[:, -1][None, :]).astype(np.float32))

    # RotatE0 expansion of rvec: normalize each complex pair, append conjugates
    norm = jnp.maximum(jnp.linalg.norm(rvec, axis=2, keepdims=True), 1e-12)
    rvec_n = rvec / norm
    conj = rvec_n * jnp.array([1.0, -1.0], dtype=jnp.float32)
    rvec_exp = jnp.stack([rvec_n, conj], axis=1).reshape(num_etype, Dh, 2)

    # feature-layout permutations: interleaved [r0,i0,r1,i1,...] -> packed [re|im]
    pack_perm = np.concatenate([np.arange(0, D, 2), np.arange(1, D, 2)])
    full_perm = np.concatenate([h * D + pack_perm for h in range(H)])

    # ---------------- build batched inputs for the metapath kernel ----------
    edata_list, c1_list, c2_list, watt_list, adj_list = [], [], [], [], []
    targets_local_list, targets_global = [], None
    for mp in mptypes:
        etypes = ntype_mptype_etypes["A"][mp]
        mpinst = mptype_mpinstances[mp]
        iftargets = mptype_iftargets[mp]

        edata = features[jnp.asarray(mpinst)]                      # (E, L, D)
        edata_p = edata[..., pack_perm].reshape(E, L * D)          # packed per position
        rot = compute_final_rvec(rvec_exp, etypes, Dh)             # (L, D) [re|im]
        r_re, r_im = rot[:, :Dh], rot[:, Dh:]
        c1 = jnp.concatenate([r_re, r_re], axis=1).reshape(1, L * D)
        c2 = jnp.concatenate([r_im, r_im], axis=1).reshape(1, L * D)
        attn1t = mp_params[mp]["attn1"][:, pack_perm].T            # (D, H) packed
        attn2t = mp_params[mp]["attn2"][0][:, pack_perm].T         # (D, H) packed
        watt = jnp.concatenate([attn1t, attn2t], axis=0)           # (2D, H)

        edata_list.append(edata_p)
        c1_list.append(c1)
        c2_list.append(c2)
        watt_list.append(watt)
        adj_list.append(mptype_adj[mp])

        targets_local = np.where(iftargets[:, 1] == 1)[0]
        targets_global = iftargets[targets_local, 0]
        targets_local_list.append(targets_local)

    edata_all = jnp.stack(edata_list, axis=0)                      # (M, E, L*D)
    c1_all = jnp.stack(c1_list, axis=0)                            # (M, 1, L*D)
    c2_all = jnp.stack(c2_list, axis=0)                            # (M, 1, L*D)
    watt_all = jnp.stack(watt_list, axis=0)                        # (M, 2D, H)
    adj_all = jnp.stack(adj_list, axis=0)                          # (M, N, E)

    # -------- forward: all metapath types in one grid-parallel pallas_call ---
    ft_all = run_mptype(edata_all, c1_all, c2_all, watt_all, adj_all)  # (M, N, H*D)

    # per-metapath target selection, stacked along rows for the combine kernel
    feats_rows = []
    for mi in range(M):
        tl = targets_local_list[mi]
        feats_rows.append(ft_all[mi][jnp.asarray(tl)])             # (Nt, H*D)
    Nt = feats_rows[0].shape[0]
    feats_2d = jnp.concatenate(feats_rows, axis=0)                 # (M*Nt, H*D)

    # fc weights permuted once so the packed feature layout stays end-to-end
    fc1_wt_p = fc1_w[:, jnp.asarray(full_perm)].T                  # (H*D, adim)
    fc_wt_p = fc_w[:, jnp.asarray(full_perm)].T                    # (H*D, odim)

    out = run_combine(feats_2d, Nt,
                      fc1_wt_p, fc1_b.reshape(1, -1), fc2_w,
                      fc_wt_p, fc_b.reshape(1, -1))                # (Nt, odim)

    out = jax.block_until_ready(out)
    node_features = {int(n): out[i] for i, n in enumerate(targets_global)}

    assert out.shape == (NT, odim) and out.dtype == jnp.float32
    assert np.isfinite(np.asarray(out)).all()
    print("KERNEL_OK")
</pallas_src>

<mosaic_0001>
module attributes {stable_mosaic.version = 11 : i64} {
  func.func @mptype_kernel(%arg0: i32, %arg1: memref<1x24x96xf32, #tpu.memory_space<vmem>>, %arg2: memref<1x1x96xf32, #tpu.memory_space<vmem>>, %arg3: memref<1x1x96xf32, #tpu.memory_space<vmem>>, %arg4: memref<1x64x2xf32, #tpu.memory_space<vmem>>, %arg5: memref<1x8x24xf32, #tpu.memory_space<vmem>>, %arg6: memref<1x8x64xf32, #tpu.memory_space<vmem>>, %arg7: memref<24x64xf32, #tpu.memory_space<vmem>>, %arg8: memref<16x24xf32, #tpu.memory_space<vmem>>) attributes {dimension_semantics = [#tpu.dimension_semantics<parallel>], iteration_bounds = array<i64: 2>, scalar_prefetch = 0 : i64, scratch_operands = 2 : i64, tpu.core_type = #tpu.core_type<tc>, window_params = [{transform_indices = @transform_0, window_bounds = array<i64: 1, 24, 96>}, {transform_indices = @transform_1, window_bounds = array<i64: 1, 1, 96>}, {transform_indices = @transform_2, window_bounds = array<i64: 1, 1, 96>}, {transform_indices = @transform_3, window_bounds = array<i64: 1, 64, 2>}, {transform_indices = @transform_4, window_bounds = array<i64: 1, 8, 24>}, {transform_indices = @transform_5, window_bounds = array<i64: 1, 8, 64>}]} {
    %c0 = arith.constant 0 : index
    %c0_0 = arith.constant 0 : index
    %c0_1 = arith.constant 0 : index
    %0 = vector.load %arg1[%c0, %c0_0, %c0_1] : memref<1x24x96xf32, #tpu.memory_space<vmem>>, vector<1x24x96xf32>
    %1 = vector.shape_cast %0 : vector<1x24x96xf32> to vector<24x96xf32>
    %c0_2 = arith.constant 0 : index
    %c0_3 = arith.constant 0 : index
    %c0_4 = arith.constant 0 : index
    %2 = vector.load %arg2[%c0_2, %c0_3, %c0_4] : memref<1x1x96xf32, #tpu.memory_space<vmem>>, vector<1x1x96xf32>
    %3 = vector.shape_cast %2 : vector<1x1x96xf32> to vector<1x96xf32>
    %4 = vector.broadcast %3 : vector<1x96xf32> to vector<24x96xf32>
    %5 = arith.mulf %1, %4 : vector<24x96xf32>
    %c0_5 = arith.constant 0 : index
    %c0_6 = arith.constant 0 : index
    %c0_7 = arith.constant 0 : index
    %6 = vector.load %arg3[%c0_5, %c0_6, %c0_7] : memref<1x1x96xf32, #tpu.memory_space<vmem>>, vector<1x1x96xf32>
    %7 = vector.shape_cast %6 : vector<1x1x96xf32> to vector<1x96xf32>
    %8 = vector.broadcast %7 : vector<1x96xf32> to vector<24x96xf32>
    %9 = arith.mulf %1, %8 : vector<24x96xf32>
    %10 = vector.extract_strided_slice %5 {offsets = [0, 0], sizes = [24, 32], strides = [1, 1]} : vector<24x96xf32> to vector<24x32xf32>
    %11 = vector.extract_strided_slice %9 {offsets = [0, 0], sizes = [24, 32], strides = [1, 1]} : vector<24x96xf32> to vector<24x32xf32>
    %12 = vector.extract_strided_slice %5 {offsets = [0, 32], sizes = [24, 32], strides = [1, 1]} : vector<24x96xf32> to vector<24x32xf32>
    %13 = arith.addf %10, %12 : vector<24x32xf32>
    %14 = vector.extract_strided_slice %9 {offsets = [0, 32], sizes = [24, 32], strides = [1, 1]} : vector<24x96xf32> to vector<24x32xf32>
    %15 = arith.addf %11, %14 : vector<24x32xf32>
    %16 = vector.extract_strided_slice %5 {offsets = [0, 64], sizes = [24, 32], strides = [1, 1]} : vector<24x96xf32> to vector<24x32xf32>
    %17 = arith.addf %13, %16 : vector<24x32xf32>
    %18 = vector.extract_strided_slice %9 {offsets = [0, 64], sizes = [24, 32], strides = [1, 1]} : vector<24x96xf32> to vector<24x32xf32>
    %19 = arith.addf %15, %18 : vector<24x32xf32>
    %20 = vector.extract_strided_slice %17 {offsets = [0, 0], sizes = [24, 16], strides = [1, 1]} : vector<24x32xf32> to vector<24x16xf32>
    %21 = vector.extract_strided_slice %19 {offsets = [0, 16], sizes = [24, 16], strides = [1, 1]} : vector<24x32xf32> to vector<24x16xf32>
    %22 = arith.subf %20, %21 : vector<24x16xf32>
    %cst = arith.constant 0.333333343 : f32
    %23 = vector.broadcast %cst : f32 to vector<24x16xf32>
    %24 = arith.mulf %22, %23 : vector<24x16xf32>
    %25 = vector.extract_strided_slice %19 {offsets = [0, 0], sizes = [24, 16], strides = [1, 1]} : vector<24x32xf32> to vector<24x16xf32>
    %26 = vector.extract_strided_slice %17 {offsets = [0, 16], sizes = [24, 16], strides = [1, 1]} : vector<24x32xf32> to vector<24x16xf32>
    %27 = arith.addf %25, %26 : vector<24x16xf32>
    %cst_8 = arith.constant 0.333333343 : f32
    %28 = vector.broadcast %cst_8 : f32 to vector<24x16xf32>
    %29 = arith.mulf %27, %28 : vector<24x16xf32>
    %30 = vector.extract_strided_slice %1 {offsets = [0, 64], sizes = [24, 32], strides = [1, 1]} : vector<24x96xf32> to vector<24x32xf32>
    %c0_9 = arith.constant 0 : index
    %c0_10 = arith.constant 0 : index
    %31 = vector.load %arg7[%c0_9, %c0_10] : memref<24x64xf32, #tpu.memory_space<vmem>>, vector<24x32xf32>
    tpu.vector_store %arg7[%c0_9, %c0_10], %30 {strides = array<i32>} : memref<24x64xf32, #tpu.memory_space<vmem>>, vector<24x32xf32>,
    %c0_11 = arith.constant 0 : index
    %c32 = arith.constant 32 : index
    %32 = vector.load %arg7[%c0_11, %c32] : memref<24x64xf32, #tpu.memory_space<vmem>>, vector<24x16xf32>
    tpu.vector_store %arg7[%c0_11, %c32], %24 {strides = array<i32>} : memref<24x64xf32, #tpu.memory_space<vmem>>, vector<24x16xf32>,
    %c0_12 = arith.constant 0 : index
    %c48 = arith.constant 48 : index
    %33 = vector.load %arg7[%c0_12, %c48] : memref<24x64xf32, #tpu.memory_space<vmem>>, vector<24x16xf32>
    tpu.vector_store %arg7[%c0_12, %c48], %29 {strides = array<i32>} : memref<24x64xf32, #tpu.memory_space<vmem>>, vector<24x16xf32>,
    %c0_13 = arith.constant 0 : index
    %c0_14 = arith.constant 0 : index
    %34 = vector.load %arg7[%c0_13, %c0_14] : memref<24x64xf32, #tpu.memory_space<vmem>>, vector<24x64xf32>
    %c0_15 = arith.constant 0 : index
    %c0_16 = arith.constant 0 : index
    %c0_17 = arith.constant 0 : index
    %35 = vector.load %arg4[%c0_15, %c0_16, %c0_17] : memref<1x64x2xf32, #tpu.memory_space<vmem>>, vector<1x64x2xf32>
    %36 = vector.shape_cast %35 : vector<1x64x2xf32> to vector<64x2xf32>
    %cst_18 = arith.constant dense<0.000000e+00> : vector<24x2xf32>
    %37 = tpu.matmul %34, %36, %cst_18 {dimension_numbers = #tpu.dot_dimension_numbers<[1], [0], [0], [1], [0, 0, 1, 1], [], []>} : vector<24x64xf32>, vector<64x2xf32>, vector<24x2xf32> -> vector<24x2xf32>
    %cst_19 = arith.constant 0.000000e+00 : f32
    %38 = vector.broadcast %cst_19 : f32 to vector<24x2xf32>
    %39 = arith.cmpf oge, %37, %38 : vector<24x2xf32>
    %cst_20 = arith.constant 0.00999999977 : f32
    %40 = vector.broadcast %cst_20 : f32 to vector<24x2xf32>
    %41 = arith.mulf %40, %37 : vector<24x2xf32>
    %42 = arith.select %39, %37, %41 : vector<24x2xi1>, vector<24x2xf32>
    %c0_21 = arith.constant 0 : index
    %c0_22 = arith.constant 0 : index
    %c0_23 = arith.constant 0 : index
    %43 = vector.load %arg5[%c0_21, %c0_22, %c0_23] : memref<1x8x24xf32, #tpu.memory_space<vmem>>, vector<1x8x24xf32>
    %44 = vector.shape_cast %43 : vector<1x8x24xf32> to vector<8x24xf32>
    %cst_24 = arith.constant 0.000000e+00 : f32
    %45 = vector.broadcast %cst_24 : f32 to vector<8x24xf32>
    %46 = arith.cmpf ogt, %44, %45 : vector<8x24xf32>
    %47 = vector.extract_strided_slice %42 {offsets = [0, 0], sizes = [24, 1], strides = [1, 1]} : vector<24x2xf32> to vector<24x1xf32>
    %48 = vector.shape_cast %47 : vector<24x1xf32> to vector<24xf32>
    %49 = vector.shape_cast %48 : vector<24xf32> to vector<1x24xf32>
    %cst_25 = arith.constant 0xFF800000 : f32
    %50 = vector.shape_cast %49 : vector<1x24xf32> to vector<1x24xf32>
    %51 = vector.broadcast %50 : vector<1x24xf32> to vector<8x24xf32>
    %52 = vector.broadcast %cst_25 : f32 to vector<8x24xf32>
    %53 = arith.select %46, %51, %52 : vector<8x24xi1>, vector<8x24xf32>
    %cst_26 = arith.constant dense<0xFF800000> : vector<8xf32>
    %54 = vector.multi_reduction <maximumf>, %53, %cst_26 [1] : vector<8x24xf32> to vector<8xf32>
    %55 = vector.shape_cast %54 : vector<8xf32> to vector<8x1xf32>
    %56 = vector.broadcast %49 : vector<1x24xf32> to vector<8x24xf32>
    %57 = vector.broadcast %55 : vector<8x1xf32> to vector<8x24xf32>
    %58 = arith.subf %56, %57 : vector<8x24xf32>
    %59 = math.exp %58 : vector<8x24xf32>
    %cst_27 = arith.constant 0.000000e+00 : f32
    %60 = vector.broadcast %cst_27 : f32 to vector<8x24xf32>
    %61 = arith.select %46, %59, %60 : vector<8x24xi1>, vector<8x24xf32>
    %cst_28 = arith.constant dense<0.000000e+00> : vector<8xf32>
    %62 = vector.multi_reduction <add>, %61, %cst_28 [1] : vector<8x24xf32> to vector<8xf32>
    %63 = vector.shape_cast %62 : vector<8xf32> to vector<8x1xf32>
    %cst_29 = arith.constant 0.000000e+00 : f32
    %64 = vector.broadcast %cst_29 : f32 to vector<8x1xf32>
    %65 = arith.cmpf ogt, %63, %64 : vector<8x1xf32>
    %cst_30 = arith.constant 1.000000e+00 : f32
    %66 = vector.broadcast %cst_30 : f32 to vector<8x1xf32>
    %67 = arith.divf %66, %63 : vector<8x1xf32>
    %cst_31 = arith.constant 0.000000e+00 : f32
    %68 = vector.broadcast %cst_31 : f32 to vector<8x1xf32>
    %69 = arith.select %65, %67, %68 : vector<8x1xi1>, vector<8x1xf32>
    %70 = vector.broadcast %69 : vector<8x1xf32> to vector<8x24xf32>
    %71 = arith.mulf %61, %70 : vector<8x24xf32>
    %c0_32 = arith.constant 0 : index
    %c0_33 = arith.constant 0 : index
    %72 = vector.load %arg8[%c0_32, %c0_33] : memref<16x24xf32, #tpu.memory_space<vmem>>, vector<8x24xf32>
    tpu.vector_store %arg8[%c0_32, %c0_33], %71 {strides = array<i32>} : memref<16x24xf32, #tpu.memory_space<vmem>>, vector<8x24xf32>,
    %73 = vector.extract_strided_slice %42 {offsets = [0, 1], sizes = [24, 1], strides = [1, 1]} : vector<24x2xf32> to vector<24x1xf32>
    %74 = vector.shape_cast %73 : vector<24x1xf32> to vector<24xf32>
    %75 = vector.shape_cast %74 : vector<24xf32> to vector<1x24xf32>
    %cst_34 = arith.constant 0xFF800000 : f32
    %76 = vector.shape_cast %75 : vector<1x24xf32> to vector<1x24xf32>
    %77 = vector.broadcast %76 : vector<1x24xf32> to vector<8x24xf32>
    %78 = vector.broadcast %cst_34 : f32 to vector<8x24xf32>
    %79 = arith.select %46, %77, %78 : vector<8x24xi1>, vector<8x24xf32>
    %cst_35 = arith.constant dense<0xFF800000> : vector<8xf32>
    %80 = vector.multi_reduction <maximumf>, %79, %cst_35 [1] : vector<8x24xf32> to vector<8xf32>
    %81 = vector.shape_cast %80 : vector<8xf32> to vector<8x1xf32>
    %82 = vector.broadcast %75 : vector<1x24xf32> to vector<8x24xf32>
    %83 = vector.broadcast %81 : vector<8x1xf32> to vector<8x24xf32>
    %84 = arith.subf %82, %83 : vector<8x24xf32>
    %85 = math.exp %84 : vector<8x24xf32>
    %cst_36 = arith.constant 0.000000e+00 : f32
    %86 = vector.broadcast %cst_36 : f32 to vector<8x24xf32>
    %87 = arith.select %46, %85, %86 : vector<8x24xi1>, vector<8x24xf32>
    %cst_37 = arith.constant dense<0.000000e+00> : vector<8xf32>
    %88 = vector.multi_reduction <add>, %87, %cst_37 [1] : vector<8x24xf32> to vector<8xf32>
    %89 = vector.shape_cast %88 : vector<8xf32> to vector<8x1xf32>
    %cst_38 = arith.constant 0.000000e+00 : f32
    %90 = vector.broadcast %cst_38 : f32 to vector<8x1xf32>
    %91 = arith.cmpf ogt, %89, %90 : vector<8x1xf32>
    %cst_39 = arith.constant 1.000000e+00 : f32
    %92 = vector.broadcast %cst_39 : f32 to vector<8x1xf32>
    %93 = arith.divf %92, %89 : vector<8x1xf32>
    %cst_40 = arith.constant 0.000000e+00 : f32
    %94 = vector.broadcast %cst_40 : f32 to vector<8x1xf32>
    %95 = arith.select %91, %93, %94 : vector<8x1xi1>, vector<8x1xf32>
    %96 = vector.broadcast %95 : vector<8x1xf32> to vector<8x24xf32>
    %97 = arith.mulf %87, %96 : vector<8x24xf32>
    %c8 = arith.constant 8 : index
    %c0_41 = arith.constant 0 : index
    %98 = vector.load %arg8[%c8, %c0_41] : memref<16x24xf32, #tpu.memory_space<vmem>>, vector<8x24xf32>
    tpu.vector_store %arg8[%c8, %c0_41], %97 {strides = array<i32>} : memref<16x24xf32, #tpu.memory_space<vmem>>, vector<8x24xf32>,
    %c0_42 = arith.constant 0 : index
    %c32_43 = arith.constant 32 : index
    %99 = vector.load %arg7[%c0_42, %c32_43] : memref<24x64xf32, #tpu.memory_space<vmem>>, vector<24x32xf32>
    %c0_44 = arith.constant 0 : index
    %c0_45 = arith.constant 0 : index
    %100 = vector.load %arg8[%c0_44, %c0_45] : memref<16x24xf32, #tpu.memory_space<vmem>>, vector<16x24xf32>
    %cst_46 = arith.constant dense<0.000000e+00> : vector<16x32xf32>
    %101 = tpu.matmul %100, %99, %cst_46 {dimension_numbers = #tpu.dot_dimension_numbers<[1], [0], [0], [1], [0, 0, 1, 1], [], []>} : vector<16x24xf32>, vector<24x32xf32>, vector<16x32xf32> -> vector<16x32xf32>
    %102 = vector.extract_strided_slice %101 {offsets = [0, 0], sizes = [8, 32], strides = [1, 1]} : vector<16x32xf32> to vector<8x32xf32>
    %c0_47 = arith.constant 0 : index
    %c0_48 = arith.constant 0 : index
    %c0_49 = arith.constant 0 : index
    %103 = vector.load %arg6[%c0_47, %c0_48, %c0_49] : memref<1x8x64xf32, #tpu.memory_space<vmem>>, vector<1x8x32xf32>
    %104 = vector.shape_cast %103 : vector<1x8x32xf32> to vector<8x32xf32>
    %105 = vector.shape_cast %102 : vector<8x32xf32> to vector<1x8x32xf32>
    tpu.vector_store %arg6[%c0_47, %c0_48, %c0_49], %105 {strides = array<i32>} : memref<1x8x64xf32, #tpu.memory_space<vmem>>, vector<1x8x32xf32>,
    %106 = vector.extract_strided_slice %101 {offsets = [8, 0], sizes = [8, 32], strides = [1, 1]} : vector<16x32xf32> to vector<8x32xf32>
    %c0_50 = arith.constant 0 : index
    %c0_51 = arith.constant 0 : index
    %c32_52 = arith.constant 32 : index
    %107 = vector.load %arg6[%c0_50, %c0_51, %c32_52] : memref<1x8x64xf32, #tpu.memory_space<vmem>>, vector<1x8x32xf32>
    %108 = vector.shape_cast %107 : vector<1x8x32xf32> to vector<8x32xf32>
    %109 = vector.shape_cast %106 : vector<8x32xf32> to vector<1x8x32xf32>
    tpu.vector_store %arg6[%c0_50, %c0_51, %c32_52], %109 {strides = array<i32>} : memref<1x8x64xf32, #tpu.memory_space<vmem>>, vector<1x8x32xf32>,
    return
  }
  func.func @transform_0(%arg0: i32) -> (i32, i32, i32) {
    %c0_i32 = arith.constant 0 : i32
    %c0_i32_0 = arith.constant 0 : i32
    %c0_i32_1 = arith.constant 0 : i32
    return %arg0, %c0_i32, %c0_i32_0 : i32, i32, i32
  }
  func.func @transform_1(%arg0: i32) -> (i32, i32, i32) {
    %c0_i32 = arith.constant 0 : i32
    %c0_i32_0 = arith.constant 0 : i32
    %c0_i32_1 = arith.constant 0 : i32
    return %arg0, %c0_i32, %c0_i32_0 : i32, i32, i32
  }
  func.func @transform_2(%arg0: i32) -> (i32, i32, i32) {
    %c0_i32 = arith.constant 0 : i32
    %c0_i32_0 = arith.constant 0 : i32
    %c0_i32_1 = arith.constant 0 : i32
    return %arg0, %c0_i32, %c0_i32_0 : i32, i32, i32
  }
  func.func @transform_3(%arg0: i32) -> (i32, i32, i32) {
    %c0_i32 = arith.constant 0 : i32
    %c0_i32_0 = arith.constant 0 : i32
    %c0_i32_1 = arith.constant 0 : i32
    return %arg0, %c0_i32, %c0_i32_0 : i32, i32, i32
  }
  func.func @transform_4(%arg0: i32) -> (i32, i32, i32) {
    %c0_i32 = arith.constant 0 : i32
    %c0_i32_0 = arith.constant 0 : i32
    %c0_i32_1 = arith.constant 0 : i32
    return %arg0, %c0_i32, %c0_i32_0 : i32, i32, i32
  }
  func.func @transform_5(%arg0: i32) -> (i32, i32, i32) {
    %c0_i32 = arith.constant 0 : i32
    %c0_i32_0 = arith.constant 0 : i32
    %c0_i32_1 = arith.constant 0 : i32
    return %arg0, %c0_i32, %c0_i32_0 : i32, i32, i32
  }
}

</mosaic_0001>

<llo_original>
// kernel: tpu_custom_call.1
$region0: #{tpu_custom_call.1}
  #allocation0 [shape = 'u32[]', space=smem, size = 0x4, offset = 0x4, fixed_abs, tag = 'smem constant byte address 0x4 - core index']
  #allocation1 [shape = 'u32[144,128]{1,0:T(1,128)}', space=vmem, size = 0x12000, scoped, tag = 'internal scratch']
  #allocation2 [shape = 'f32[24,64]{1,0:T(8,128)}', space=vmem, size = 0x3000, scoped, tag = 'scratch operand']
  #allocation3 [shape = 'f32[16,24]{1,0:T(8,128)}', space=vmem, size = 0x2000, scoped, tag = 'scratch operand']
  %s0 = inlined_call_operand.vmem [shape: f32[2,24,96], index: 0, kind: input, shape index: {}]
  %s1 = inlined_call_operand.vmem [shape: f32[2,1,96], index: 1, kind: input, shape index: {}]
  %s2 = inlined_call_operand.vmem [shape: f32[2,1,96], index: 2, kind: input, shape index: {}]
  %s3 = inlined_call_operand.vmem [shape: f32[2,64,2], index: 3, kind: input, shape index: {}]
  %s4 = inlined_call_operand.vmem [shape: f32[2,8,24], index: 4, kind: input, shape index: {}]
  %s5 = inlined_call_operand.hbm [shape: f32[2,8,64], index: 5, kind: output, shape index: {}]
  %s6 = sld [smem:[#allocation0]]
  $region53: #{tpu_custom_call.1} parent=0
    _
  %s8 = ssub.s32 1, %s6
  %s9 = scalar_select 0, %s8, %s6
  $region1: #{tpu_custom_call.1} parent=0
    #allocation4 [shape = 'u8[8192]{0}', space=vmem, size = 0x2000, scoped, tag = 'output window, operand 0']
    #allocation5 [shape = 's32[2]{0}', space=sflag, size = 0x8, scoped, tag = 'scoped memory for tpu_custom_call.1']
    %10 = vsyncpa [#allocation5], 0
    %s11 = scalar_lea.sflag [#allocation5], 1
    %12 = vsyncpa %s11, 0
    loop: start=0, step=1, limit=4
    $region2: #{tpu_custom_call.1} parent=1 // loop_pre_header
      _
    $region3: #{tpu_custom_call.1} parent=1 // loop_header
      %s14 = sphi 0, %s18
      %p15 = scmp.ge.s32.totalorder %s14, 4
      %s24 = sphi 0, %s26
      %s27 = sphi 0, %s24
      %s28 = sphi 0, %s27
      %s44 = sphi 0, %s28
      %s50 = sphi 0, %s52
      %s53 = sphi 0, %s50
      %s54 = sphi 0, %s53
      %s70 = sphi 0, %s54
      %s76 = sphi 0, %s78
      %s79 = sphi 0, %s76
      %s80 = sphi 0, %s79
      %s96 = sphi 0, %s80
      %s102 = sphi 0, %s104
      %s105 = sphi 0, %s102
      %s106 = sphi 0, %s105
      %s122 = sphi 0, %s106
      %s128 = sphi 0, %s130
      %s131 = sphi 0, %s128
      %s132 = sphi 0, %s131
      %s148 = sphi 0, %s132
      %s154 = sphi 0, %s156
      %s157 = sphi 0, %s154
      %s158 = sphi 0, %s157
      %s174 = sphi 0, %s158
    $region4: #{tpu_custom_call.1} parent=1 // loop_header_branch
      %17 = sbr.rel (%p15) target = $region8
    $region5: #{tpu_custom_call.1} parent=1 // loop_body
      %s19 = ssub.s32 %s14, 1
      %s20 = ssub.s32 %s14, 2
      %s21 = sadd.s32 %s14, 1
      %s22 = ssub.s32 %s14, %s21
      %p23 = scmp.eq.s32.totalorder %s22, 0
      %s25 = sadd.s32 %s24, 1
      %s26 = scalar_select %p23, %s24, %s25
      %p29 = pneg %p23
      %p30 = scmp.eq.s32.totalorder %s14, 1
      %p31 = por %p29, %p30
      %p32 = scmp.ne.s32.totalorder %s24, %s27
      %p33 = scmp.eq.s32.totalorder %s14, 0
      %p34 = por %p32, %p33
      %p35 = scmp.ne.s32.totalorder %s24, %s27
      %p36 = scmp.eq.s32.totalorder %s19, 1
      %p37 = por %p35, %p36
      %p38 = scmp.ne.s32.totalorder %s27, %s28
      %p39 = scmp.eq.s32.totalorder %s19, 0
      %p40 = por %p38, %p39
      %p41 = scmp.ne.s32.totalorder %s27, %s28
      %p42 = scmp.eq.s32.totalorder %s20, 1
      %p43 = por %p41, %p42
      %p45 = scmp.ne.s32.totalorder %s28, %s44
      %p46 = scmp.eq.s32.totalorder %s20, 0
      %p47 = por %p45, %p46
      %s48 = ssub.s32 %s14, %s21
      %p49 = scmp.eq.s32.totalorder %s48, 0
      %s51 = sadd.s32 %s50, 1
      %s52 = scalar_select %p49, %s50, %s51
      %p55 = pneg %p49
      %p56 = scmp.eq.s32.totalorder %s14, 1
      %p57 = por %p55, %p56
      %p58 = scmp.ne.s32.totalorder %s50, %s53
      %p59 = scmp.eq.s32.totalorder %s14, 0
      %p60 = por %p58, %p59
      %p61 = scmp.ne.s32.totalorder %s50, %s53
      %p62 = scmp.eq.s32.totalorder %s19, 1
      %p63 = por %p61, %p62
      %p64 = scmp.ne.s32.totalorder %s53, %s54
      %p65 = scmp.eq.s32.totalorder %s19, 0
      %p66 = por %p64, %p65
      %p67 = scmp.ne.s32.totalorder %s53, %s54
      %p68 = scmp.eq.s32.totalorder %s20, 1
      %p69 = por %p67, %p68
      %p71 = scmp.ne.s32.totalorder %s54, %s70
      %p72 = scmp.eq.s32.totalorder %s20, 0
      %p73 = por %p71, %p72
      %s74 = ssub.s32 %s14, %s21
      %p75 = scmp.eq.s32.totalorder %s74, 0
      %s77 = sadd.s32 %s76, 1
      %s78 = scalar_select %p75, %s76, %s77
      %p81 = pneg %p75
      %p82 = scmp.eq.s32.totalorder %s14, 1
      %p83 = por %p81, %p82
      %p84 = scmp.ne.s32.totalorder %s76, %s79
      %p85 = scmp.eq.s32.totalorder %s14, 0
      %p86 = por %p84, %p85
      %p87 = scmp.ne.s32.totalorder %s76, %s79
      %p88 = scmp.eq.s32.totalorder %s19, 1
      %p89 = por %p87, %p88
      %p90 = scmp.ne.s32.totalorder %s79, %s80
      %p91 = scmp.eq.s32.totalorder %s19, 0
      %p92 = por %p90, %p91
      %p93 = scmp.ne.s32.totalorder %s79, %s80
      %p94 = scmp.eq.s32.totalorder %s20, 1
      %p95 = por %p93, %p94
      %p97 = scmp.ne.s32.totalorder %s80, %s96
      %p98 = scmp.eq.s32.totalorder %s20, 0
      %p99 = por %p97, %p98
      %s100 = ssub.s32 %s14, %s21
      %p101 = scmp.eq.s32.totalorder %s100, 0
      %s103 = sadd.s32 %s102, 1
      %s104 = scalar_select %p101, %s102, %s103
      %p107 = pneg %p101
      %p108 = scmp.eq.s32.totalorder %s14, 1
      %p109 = por %p107, %p108
      %p110 = scmp.ne.s32.totalorder %s102, %s105
      %p111 = scmp.eq.s32.totalorder %s14, 0
      %p112 = por %p110, %p111
      %p113 = scmp.ne.s32.totalorder %s102, %s105
      %p114 = scmp.eq.s32.totalorder %s19, 1
      %p115 = por %p113, %p114
      %p116 = scmp.ne.s32.totalorder %s105, %s106
      %p117 = scmp.eq.s32.totalorder %s19, 0
      %p118 = por %p116, %p117
      %p119 = scmp.ne.s32.totalorder %s105, %s106
      %p120 = scmp.eq.s32.totalorder %s20, 1
      %p121 = por %p119, %p120
      %p123 = scmp.ne.s32.totalorder %s106, %s122
      %p124 = scmp.eq.s32.totalorder %s20, 0
      %p125 = por %p123, %p124
      %s126 = ssub.s32 %s14, %s21
      %p127 = scmp.eq.s32.totalorder %s126, 0
      %s129 = sadd.s32 %s128, 1
      %s130 = scalar_select %p127, %s128, %s129
      %p133 = pneg %p127
      %p134 = scmp.eq.s32.totalorder %s14, 1
      %p135 = por %p133, %p134
      %p136 = scmp.ne.s32.totalorder %s128, %s131
      %p137 = scmp.eq.s32.totalorder %s14, 0
      %p138 = por %p136, %p137
      %p139 = scmp.ne.s32.totalorder %s128, %s131
      %p140 = scmp.eq.s32.totalorder %s19, 1
      %p141 = por %p139, %p140
      %p142 = scmp.ne.s32.totalorder %s131, %s132
      %p143 = scmp.eq.s32.totalorder %s19, 0
      %p144 = por %p142, %p143
      %p145 = scmp.ne.s32.totalorder %s131, %s132
      %p146 = scmp.eq.s32.totalorder %s20, 1
      %p147 = por %p145, %p146
      %p149 = scmp.ne.s32.totalorder %s132, %s148
      %p150 = scmp.eq.s32.totalorder %s20, 0
      %p151 = por %p149, %p150
      %s152 = ssub.s32 %s14, %s21
      %p153 = scmp.eq.s32.totalorder %s152, 0
      %s155 = sadd.s32 %s154, 1
      %s156 = scalar_select %p153, %s154, %s155
      %p159 = pneg %p153
      %p160 = scmp.eq.s32.totalorder %s14, 1
      %p161 = por %p159, %p160
      %p162 = scmp.ne.s32.totalorder %s154, %s157
      %p163 = scmp.eq.s32.totalorder %s14, 0
      %p164 = por %p162, %p163
      %p165 = scmp.ne.s32.totalorder %s154, %s157
      %p166 = scmp.eq.s32.totalorder %s19, 1
      %p167 = por %p165, %p166
      %p168 = scmp.ne.s32.totalorder %s157, %s158
      %p169 = scmp.eq.s32.totalorder %s19, 0
      %p170 = por %p168, %p169
      %p171 = scmp.ne.s32.totalorder %s157, %s158
      %p172 = scmp.eq.s32.totalorder %s20, 1
      %p173 = por %p171, %p172
      %p175 = scmp.ne.s32.totalorder %s158, %s174
      %p176 = scmp.eq.s32.totalorder %s20, 0
      %p177 = por %p175, %p176
      %p178 = scmp.le.s32.totalorder 1, %s14
      %p179 = scmp.lt.s32.totalorder %s14, 3
      %p180 = pnand %p178, %p179
      %p181 = pneg %p180
      // Predicated region
      $region9: #{tpu_custom_call.1} parent=5 // pred_check
        _
      $region10: #{tpu_custom_call.1} parent=5 // pred_check_branch
        %183 = sbr.rel (%p180) target = $region12
      $region11: #{tpu_custom_call.1} parent=5 // pred_region
        %s184 = ssub.s32 %s14, 1
      $region12: #{tpu_custom_call.1} parent=5 // pred_fallthru
        _
      %p185 = scmp.lt.s32.totalorder %s14, 2
      // Predicated region
      $region13: #{tpu_custom_call.1} parent=5 // pred_check
        %p186 = pneg %p185
      $region14: #{tpu_custom_call.1} parent=5 // pred_check_branch
        %188 = sbr.rel (%p186) target = $region16
      $region15: #{tpu_custom_call.1} parent=5 // pred_region
        // Predicated region
        $region17: #{tpu_custom_call.1} parent=15 // pred_check
          %p189 = pneg %p34
        $region18: #{tpu_custom_call.1} parent=15 // pred_check_branch
          %191 = sbr.rel (%p189) target = $region20
        $region19: #{tpu_custom_call.1} parent=15 // pred_region
          %p192 = scmp.lt.s32.totalorder %s14, 1
          %s193 = scalar_select %p192, %s14, 1
          %s194 = smul.addr %s193, 3
          %s195 = smul.addr %s194, 8
          %s196 = scalar_lea.vmem %s0, %s195
        $region20: #{tpu_custom_call.1} parent=15 // pred_fallthru
          _
        // Predicated region
        $region21: #{tpu_custom_call.1} parent=15 // pred_check
          %p197 = pneg %p60
        $region22: #{tpu_custom_call.1} parent=15 // pred_check_branch
          %199 = sbr.rel (%p197) target = $region24
        $region23: #{tpu_custom_call.1} parent=15 // pred_region
          %p200 = scmp.lt.s32.totalorder %s14, 1
          %s201 = scalar_select %p200, %s14, 1
          %s202 = scalar_lea.vmem %s1, %s201
        $region24: #{tpu_custom_call.1} parent=15 // pred_fallthru
          _
        // Predicated region
        $region25: #{tpu_custom_call.1} parent=15 // pred_check
          %p203 = pneg %p86
        $region26: #{tpu_custom_call.1} parent=15 // pred_check_branch
          %205 = sbr.rel (%p203) target = $region28
        $region27: #{tpu_custom_call.1} parent=15 // pred_region
          %p206 = scmp.lt.s32.totalorder %s14, 1
          %s207 = scalar_select %p206, %s14, 1
          %s208 = scalar_lea.vmem %s2, %s207
        $region28: #{tpu_custom_call.1} parent=15 // pred_fallthru
          _
        // Predicated region
        $region29: #{tpu_custom_call.1} parent=15 // pred_check
          %p209 = pneg %p112
        $region30: #{tpu_custom_call.1} parent=15 // pred_check_branch
          %211 = sbr.rel (%p209) target = $region32
        $region31: #{tpu_custom_call.1} parent=15 // pred_region
          %p212 = scmp.lt.s32.totalorder %s14, 1
          %s213 = scalar_select %p212, %s14, 1
          %s214 = smul.addr %s213, 8
          %s215 = smul.addr %s214, 8
          %s216 = scalar_lea.vmem %s3, %s215
        $region32: #{tpu_custom_call.1} parent=15 // pred_fallthru
          _
        // Predicated region
        $region33: #{tpu_custom_call.1} parent=15 // pred_check
          %p217 = pneg %p138
        $region34: #{tpu_custom_call.1} parent=15 // pred_check_branch
          %219 = sbr.rel (%p217) target = $region36
        $region35: #{tpu_custom_call.1} parent=15 // pred_region
          %p220 = scmp.lt.s32.totalorder %s14, 1
          %s221 = scalar_select %p220, %s14, 1
          %s222 = smul.addr %s221, 8
          %s223 = scalar_lea.vmem %s4, %s222
        $region36: #{tpu_custom_call.1} parent=15 // pred_fallthru
          _
      $region16: #{tpu_custom_call.1} parent=5 // pred_fallthru
        _
      %p224 = scmp.le.s32.totalorder 1, %s14
      %p225 = scmp.lt.s32.totalorder %s14, 3
      %p226 = pnand %p224, %p225
      %p227 = pneg %p226
      // Predicated region
      $region37: #{tpu_custom_call.1} parent=5 // pred_check
        _
      $region38: #{tpu_custom_call.1} parent=5 // pred_check_branch
        %229 = sbr.rel (%p226) target = $region40
      $region39: #{tpu_custom_call.1} parent=5 // pred_region
        %s230 = ssub.s32 %s14, 1
        %p231 = scmp.lt.s32.totalorder %s19, 1
        %s232 = scalar_select %p231, %s19, 1
        %s233 = smul.addr %s232, 3
        %s234 = smul.addr %s233, 8
        %s235 = scalar_lea.vmem %s0, %s234
        %p236 = pneg %p40
        %p237 = pneg %p37
        %p238 = scmp.lt.s32.totalorder %s19, 1
        %s239 = scalar_select %p238, %s19, 1
        %s240 = scalar_lea.vmem %s1, %s239
        %p241 = pneg %p66
        %p242 = pneg %p63
        %p243 = scmp.lt.s32.totalorder %s19, 1
        %s244 = scalar_select %p243, %s19, 1
        %s245 = scalar_lea.vmem %s2, %s244
        %p246 = pneg %p92
        %p247 = pneg %p89
        %p248 = scmp.lt.s32.totalorder %s19, 1
        %s249 = scalar_select %p248, %s19, 1
        %s250 = smul.addr %s249, 8
        %s251 = smul.addr %s250, 8
        %s252 = scalar_lea.vmem %s3, %s251
        %p253 = pneg %p118
        %p254 = pneg %p115
        %p255 = scmp.lt.s32.totalorder %s19, 1
        %s256 = scalar_select %p255, %s19, 1
        %s257 = smul.addr %s256, 8
        %s258 = scalar_lea.vmem %s4, %s257
        %p259 = pneg %p144
        %p260 = pneg %p141
        %p261 = pneg %p170
        %p262 = pneg %p167
        %s263 = sand.u32 %s157, 1
        %s264 = scalar_lea.sflag [#allocation5], %s263
        %s265 = sand.u32 %s157, 1
        %s266 = smul.addr %s265, 8
        %s267 = scalar_lea.vmem [#allocation4], %s266
        %p268 = scmp.lt.s32.totalorder %s19, 1
        %s269 = scalar_select %p268, %s19, 1
        %s270 = smul.addr %s269, 3
        %s271 = smul.addr %s270, 8
        %s272 = scalar_lea.vmem %s0, %s271
        %p273 = scmp.lt.s32.totalorder %s19, 1
        %s274 = scalar_select %p273, %s19, 1
        %s275 = scalar_lea.vmem %s1, %s274
        %p276 = scmp.lt.s32.totalorder %s19, 1
        %s277 = scalar_select %p276, %s19, 1
        %s278 = scalar_lea.vmem %s2, %s277
        %p279 = scmp.lt.s32.totalorder %s19, 1
        %s280 = scalar_select %p279, %s19, 1
        %s281 = smul.addr %s280, 8
        %s282 = smul.addr %s281, 8
        %s283 = scalar_lea.vmem %s3, %s282
        %p284 = scmp.lt.s32.totalorder %s19, 1
        %s285 = scalar_select %p284, %s19, 1
        %s286 = smul.addr %s285, 8
        %s287 = scalar_lea.vmem %s4, %s286
        %v288 = vld [vmem:[%s272] sm:$0xff]
        %v289 = vld [vmem:[%s272 + $0x8] sm:$0xff]
        %v290 = vld [vmem:[%s272 + $0x10] sm:$0xff]
        %v291 = vld [vmem:[%s275] sm:$0x1]
        %v293 = vlaneseq
        %v294 = vshrl.u32 %v293, 7
        %v295 = vsub.s32 0, %v294
        %v296 = vrot.slane %v291, %v295
        %v298 = vmul.f32 %v288, %v296
        %v299 = vmul.f32 %v289, %v296
        %v300 = vmul.f32 %v290, %v296
        %v301 = vld [vmem:[%s278] sm:$0x1]
        %v303 = vlaneseq
        %v304 = vshrl.u32 %v303, 7
        %v305 = vsub.s32 0, %v304
        %v306 = vrot.slane %v301, %v305
        %v308 = vmul.f32 %v288, %v306
        %v309 = vmul.f32 %v289, %v306
        %v310 = vmul.f32 %v290, %v306
        %314 = vrot.lane.b32.xlu0 %v298, 96
        %v315 = vpop.permute.xlu0 %314
        %316 = vrot.lane.b32.xlu0 %v299, 96
        %v317 = vpop.permute.xlu0 %316
        %318 = vrot.lane.b32.xlu0 %v300, 96
        %v319 = vpop.permute.xlu0 %318
        %v323 = vadd.f32 %v298, %v315
        %v324 = vadd.f32 %v299, %v317
        %v325 = vadd.f32 %v300, %v319
        %329 = vrot.lane.b32.xlu0 %v308, 96
        %v330 = vpop.permute.xlu0 %329
        %331 = vrot.lane.b32.xlu0 %v309, 96
        %v332 = vpop.permute.xlu0 %331
        %333 = vrot.lane.b32.xlu0 %v310, 96
        %v334 = vpop.permute.xlu0 %333
        %v338 = vadd.f32 %v308, %v330
        %v339 = vadd.f32 %v309, %v332
        %v340 = vadd.f32 %v310, %v334
        %341 = vrot.lane.b32.xlu0 %v298, 64
        %v342 = vpop.permute.xlu0 %341
        %343 = vrot.lane.b32.xlu0 %v299, 64
        %v344 = vpop.permute.xlu0 %343
        %345 = vrot.lane.b32.xlu0 %v300, 64
        %v346 = vpop.permute.xlu0 %345
        %v350 = vadd.f32 %v323, %v342
        %v351 = vadd.f32 %v324, %v344
        %v352 = vadd.f32 %v325, %v346
        %353 = vrot.lane.b32.xlu0 %v308, 64
        %v354 = vpop.permute.xlu0 %353
        %355 = vrot.lane.b32.xlu0 %v309, 64
        %v356 = vpop.permute.xlu0 %355
        %357 = vrot.lane.b32.xlu0 %v310, 64
        %v358 = vpop.permute.xlu0 %357
        %v362 = vadd.f32 %v338, %v354
        %v363 = vadd.f32 %v339, %v356
        %v364 = vadd.f32 %v340, %v358
        %368 = vrot.lane.b32.xlu0 %v362, 112
        %v369 = vpop.permute.xlu0 %368
        %370 = vrot.lane.b32.xlu0 %v363, 112
        %v371 = vpop.permute.xlu0 %370
        %372 = vrot.lane.b32.xlu0 %v364, 112
        %v373 = vpop.permute.xlu0 %372
        %v377 = vsub.f32 %v350, %v369
        %v378 = vsub.f32 %v351, %v371
        %v379 = vsub.f32 %v352, %v373
        %v380 = vmul.f32 %v377, 0.33333334
        %v381 = vmul.f32 %v378, 0.33333334
        %v382 = vmul.f32 %v379, 0.33333334
        %386 = vrot.lane.b32.xlu0 %v350, 112
        %v387 = vpop.permute.xlu0 %386
        %388 = vrot.lane.b32.xlu0 %v351, 112
        %v389 = vpop.permute.xlu0 %388
        %390 = vrot.lane.b32.xlu0 %v352, 112
        %v391 = vpop.permute.xlu0 %390
        %v395 = vadd.f32 %v362, %v387
        %v396 = vadd.f32 %v363, %v389
        %v397 = vadd.f32 %v364, %v391
        %v398 = vmul.f32 %v395, 0.33333334
        %v399 = vmul.f32 %v396, 0.33333334
        %v400 = vmul.f32 %v397, 0.33333334
        %404 = vrot.lane.b32.xlu0 %v288, 64
        %v405 = vpop.permute.xlu0 %404
        %406 = vrot.lane.b32.xlu0 %v289, 64
        %v407 = vpop.permute.xlu0 %406
        %408 = vrot.lane.b32.xlu0 %v290, 64
        %v409 = vpop.permute.xlu0 %408
        %vm413 = vcmask 261120
        %414 = vst.msk [vmem:[#allocation2] sm:$0xff] %vm413, %v405
        %415 = vst.msk [vmem:[#allocation2 + $0x8] sm:$0xff] %vm413, %v407
        %416 = vst.msk [vmem:[#allocation2 + $0x10] sm:$0xff] %vm413, %v409
        %420 = vrot.lane.b32.xlu0 %v380, 32
        %v421 = vpop.permute.xlu0 %420
        %422 = vrot.lane.b32.xlu0 %v381, 32
        %v423 = vpop.permute.xlu0 %422
        %424 = vrot.lane.b32.xlu0 %v382, 32
        %v425 = vpop.permute.xlu0 %424
        %vm429 = vcmask 392448
        %430 = vst.msk [vmem:[#allocation2] sm:$0xff] %vm429, %v421
        %431 = vst.msk [vmem:[#allocation2 + $0x8] sm:$0xff] %vm429, %v423
        %432 = vst.msk [vmem:[#allocation2 + $0x10] sm:$0xff] %vm429, %v425
        %436 = vrot.lane.b32.xlu0 %v398, 48
        %v437 = vpop.permute.xlu0 %436
        %438 = vrot.lane.b32.xlu0 %v399, 48
        %v439 = vpop.permute.xlu0 %438
        %440 = vrot.lane.b32.xlu0 %v400, 48
        %v441 = vpop.permute.xlu0 %440
        %vm445 = vcmask 523648
        %446 = vst.msk [vmem:[#allocation2] sm:$0xff] %vm445, %v437
        %447 = vst.msk [vmem:[#allocation2 + $0x8] sm:$0xff] %vm445, %v439
        %448 = vst.msk [vmem:[#allocation2 + $0x10] sm:$0xff] %vm445, %v441
        %v449 = vld [vmem:[#allocation2] sm:$0xff]
        %v450 = vld [vmem:[#allocation2 + $0x8] sm:$0xff]
        %v451 = vld [vmem:[#allocation2 + $0x10] sm:$0xff]
        %v452 = vld [vmem:[%s283] sm:$0xff]
        %v453 = vld [vmem:[%s283 + $0x8] sm:$0xff]
        %v454 = vld [vmem:[%s283 + $0x10] sm:$0xff]
        %v455 = vld [vmem:[%s283 + $0x18] sm:$0xff]
        %v456 = vld [vmem:[%s283 + $0x20] sm:$0xff]
        %v457 = vld [vmem:[%s283 + $0x28] sm:$0xff]
        %v458 = vld [vmem:[%s283 + $0x30] sm:$0xff]
        %v459 = vld [vmem:[%s283 + $0x38] sm:$0xff]
        %vm460 = vcmask 523264
        %v462 = vsel %vm460, %v449, 0
        %v465 = vsel %vm460, %v450, 0
        %v468 = vsel %vm460, %v451, 0
        %470 = vmatprep.subr.mxu0 0.0
        %471 = vmatpush1.msra.mxu0 %v452
        %472 = vmatprep.subr.mxu0 0.0
        %473 = vmatpush1.msra.mxu0 %v453
        %474 = vmatprep.subr.mxu0 0.0
        %475 = vmatpush1.msra.mxu0 %v454
        %476 = vmatprep.subr.mxu0 0.0
        %477 = vmatpush1.msra.mxu0 %v455
        %478 = vmatprep.subr.mxu0 0.0
        %479 = vmatpush1.msra.mxu0 %v456
        %480 = vmatprep.subr.mxu0 0.0
        %481 = vmatpush1.msra.mxu0 %v457
        %482 = vmatprep.subr.mxu0 0.0
        %483 = vmatpush1.msra.mxu0 %v458
        %484 = vmatprep.subr.mxu0 0.0
        %485 = vmatpush1.msra.mxu0 %v459
        %486 = vmatprep.subr.mxu0 0.0
        %487 = vmatpush1.msra.mxu0 0.0
        %488 = vmatprep.subr.mxu0 0.0
        %489 = vmatpush1.msra.mxu0 0.0
        %490 = vmatprep.subr.mxu0 0.0
        %491 = vmatpush1.msra.mxu0 0.0
        %492 = vmatprep.subr.mxu0 0.0
        %493 = vmatpush1.msra.mxu0 0.0
        %494 = vmatprep.subr.mxu0 0.0
        %495 = vmatpush1.msra.mxu0 0.0
        %496 = vmatprep.subr.mxu0 0.0
        %497 = vmatpush1.msra.mxu0 0.0
        %498 = vmatprep.subr.mxu0 0.0
        %499 = vmatpush1.msra.mxu0 0.0
        %500 = vmatprep.subr.mxu0 0.0
        %501 = vmatpush1.msra.mxu0 0.0
        %502 = vmatprep.subr.mxu0 0.0
        %503 = vmatpush1.msra.mxu0 0.0
        %504 = vmatprep.subr.mxu0 0.0
        %505 = vmatpush1.msra.mxu0 0.0
        %506 = vmatprep.subr.mxu0 0.0
        %507 = vmatpush1.msra.mxu0 0.0
        %508 = vmatprep.subr.mxu0 0.0
        %509 = vmatpush1.msra.mxu0 0.0
        %510 = vmatprep.subr.mxu0 0.0
        %511 = vmatpush1.msra.mxu0 0.0
        %512 = vmatprep.subr.mxu0 0.0
        %513 = vmatpush1.msra.mxu0 0.0
        %514 = vmatprep.subr.mxu0 0.0
        %515 = vmatpush1.msra.mxu0 0.0
        %516 = vmatprep.subr.mxu0 0.0
        %517 = vmatpush1.msra.mxu0 0.0
        %518 = vmatprep.subr.mxu0 0.0
        %519 = vmatpush1.msra.mxu0 0.0
        %520 = vmatprep.subr.mxu0 0.0
        %521 = vmatpush1.msra.mxu0 0.0
        %522 = vmatprep.subr.mxu0 0.0
        %523 = vmatpush1.msra.mxu0 0.0
        %524 = vmatprep.subr.mxu0 0.0
        %525 = vmatpush1.msra.mxu0 0.0
        %526 = vmatprep.subr.mxu0 0.0
        %527 = vmatpush1.msra.mxu0 0.0
        %528 = vmatprep.subr.mxu0 0.0
        %529 = vmatpush1.msra.mxu0 0.0
        %530 = vmatprep.subr.mxu0 0.0
        %531 = vmatpush1.msra.mxu0 0.0
        %532 = vmatprep.subr.mxu0 0.0
        %533 = vmatpush1.msra.mxu0 0.0
        %534 = vmatprep.mubr.f32.mxu0 0.0
        %535 = vmatmul.mubr.f32.gmra.mrb[0].mxu0 %v462
        %v536 = vpop.f32.mrb[0].mxu0
        %v537 = vadd.f32 0.0, %v536
        %v538 = vpop.f32.mrb[0].mxu0
        %539 = vmatprep.mubr.f32.mxu0 0.0
        %540 = vmatmul.mubr.f32.gmra.mrb[0].mxu0 %v465
        %v541 = vpop.f32.mrb[0].mxu0
        %v542 = vadd.f32 0.0, %v541
        %v543 = vpop.f32.mrb[0].mxu0
        %544 = vmatprep.mubr.f32.mxu0 0.0
        %545 = vmatmul.mubr.f32.gmra.mrb[0].mxu0 %v468
        %v546 = vpop.f32.mrb[0].mxu0
        %v547 = vadd.f32 0.0, %v546
        %v548 = vpop.f32.mrb[0].mxu0
        %549 = vdwg.mxu0
        %vm550 = vcmp.ge.f32.partialorder %v537, 0.0
        %vm551 = vcmp.ge.f32.partialorder %v542, 0.0
        %vm552 = vcmp.ge.f32.partialorder %v547, 0.0
        %v553 = vmul.f32 %v537, 0.01
        %v554 = vmul.f32 %v542, 0.01
        %v555 = vmul.f32 %v547, 0.01
        %v556 = vsel %vm550, %v537, %v553
        %v557 = vsel %vm551, %v542, %v554
        %v558 = vsel %vm552, %v547, %v555
        %v559 = vld [vmem:[%s287] sm:$0xff]
        %vm560 = vcmp.gt.f32.partialorder %v559, 0.0
        %564 = vset.pattern.permute.xlu0 0
        %565 = vperm.xlu0 %564, %v556
        %v566 = vpop.permute.xlu0 %565
        %567 = vset.pattern.permute.xlu0 0
        %568 = vperm.xlu0 %567, %v557
        %v569 = vpop.permute.xlu0 %568
        %570 = vset.pattern.permute.xlu0 0
        %571 = vperm.xlu0 %570, %v558
        %v572 = vpop.permute.xlu0 %571
        %v573 = vlaneseq
        %v574 = vand.u32 %v573, 127
        %v575 = vlaneseq
        %v576 = vshrl.u32 %v575, 7
        %v577 = vsub.s32 %v574, %v576
        %v578 = vrot.slane %v566, %v577
        %v579 = vadd.s32 %v574, 4294967288
        %v580 = vlaneseq
        %v581 = vshrl.u32 %v580, 7
        %v582 = vsub.s32 %v579, %v581
        %v583 = vrot.slane %v569, %v582
        %vm584 = vcmask 130112
        %v585 = vsel %vm584, %v583, %v578
        %v586 = vadd.s32 %v574, 4294967280
        %v587 = vlaneseq
        %v588 = vshrl.u32 %v587, 7
        %v589 = vsub.s32 %v586, %v588
        %v590 = vrot.slane %v572, %v589
        %vm591 = vcmask 195712
        %v592 = vsel %vm591, %v590, %v585
        %vm593 = vcmask 1041409
        %vm594 = vcmask 1042434
        %v595 = vsel %vm594, %v592, %v592
        %vm596 = vcmask 1043459
        %v597 = vsel %vm596, %v592, %v595
        %vm598 = vcmask 1044484
        %v599 = vsel %vm598, %v592, %v597
        %vm600 = vcmask 1045509
        %v601 = vsel %vm600, %v592, %v599
        %vm602 = vcmask 1046534
        %v603 = vsel %vm602, %v592, %v601
        %vm604 = vcmask 1047559
        %v605 = vsel %vm604, %v592, %v603
        %v607 = vsel %vm560, %v605, -inf
        %vm608 = vcmask 195584
        %v609 = vsel %vm608, %v607, -inf
        %610 = vmax.xlane.f32.xlu0 %v609
        %v611 = vpop.xlane.xlu0 %610
        %v613 = vlaneseq
        %v614 = vshrl.u32 %v613, 7
        %v615 = vsub.s32 0, %v614
        %v616 = vrot.slane %v611, %v615
        %v617 = vlaneseq
        %v618 = vshrl.u32 %v617, 7
        %v619 = vsub.s32 1, %v618
        %v620 = vrot.slane %v611, %v619
        %v621 = vlaneseq
        %v622 = vshrl.u32 %v621, 7
        %v623 = vsub.s32 2, %v622
        %v624 = vrot.slane %v611, %v623
        %v625 = vlaneseq
        %v626 = vshrl.u32 %v625, 7
        %v627 = vsub.s32 3, %v626
        %v628 = vrot.slane %v611, %v627
        %v629 = vlaneseq
        %v630 = vshrl.u32 %v629, 7
        %v631 = vsub.s32 4, %v630
        %v632 = vrot.slane %v611, %v631
        %v633 = vlaneseq
        %v634 = vshrl.u32 %v633, 7
        %v635 = vsub.s32 5, %v634
        %v636 = vrot.slane %v611, %v635
        %v637 = vlaneseq
        %v638 = vshrl.u32 %v637, 7
        %v639 = vsub.s32 6, %v638
        %v640 = vrot.slane %v611, %v639
        %v641 = vlaneseq
        %v642 = vshrl.u32 %v641, 7
        %v643 = vsub.s32 7, %v642
        %v644 = vrot.slane %v611, %v643
        %v653 = vsub.f32 %v556, %v616
        %v654 = vsub.f32 %v557, %v616
        %v655 = vsub.f32 %v558, %v616
        %v656 = vsub.f32 %v556, %v620
        %v657 = vsub.f32 %v557, %v620
        %v658 = vsub.f32 %v558, %v620
        %v659 = vsub.f32 %v556, %v624
        %v660 = vsub.f32 %v557, %v624
        %v661 = vsub.f32 %v558, %v624
        %v662 = vsub.f32 %v556, %v628
        %v663 = vsub.f32 %v557, %v628
        %v664 = vsub.f32 %v558, %v628
        %v665 = vsub.f32 %v556, %v632
        %v666 = vsub.f32 %v557, %v632
        %v667 = vsub.f32 %v558, %v632
        %v668 = vsub.f32 %v556, %v636
        %v669 = vsub.f32 %v557, %v636
        %v670 = vsub.f32 %v558, %v636
        %v671 = vsub.f32 %v556, %v640
        %v672 = vsub.f32 %v557, %v640
        %v673 = vsub.f32 %v558, %v640
        %v674 = vsub.f32 %v556, %v644
        %v675 = vsub.f32 %v557, %v644
        %v676 = vsub.f32 %v558, %v644
        %v677 = vmul.f32 %v653, 1.442695
        %v678 = vpow.pop %v677
        %v679 = vmul.f32 %v654, 1.442695
        %v680 = vpow.pop %v679
        %v681 = vmul.f32 %v655, 1.442695
        %v682 = vpow.pop %v681
        %v683 = vmul.f32 %v656, 1.442695
        %v684 = vpow.pop %v683
        %v685 = vmul.f32 %v657, 1.442695
        %v686 = vpow.pop %v685
        %v687 = vmul.f32 %v658, 1.442695
        %v688 = vpow.pop %v687
        %v689 = vmul.f32 %v659, 1.442695
        %v690 = vpow.pop %v689
        %v691 = vmul.f32 %v660, 1.442695
        %v692 = vpow.pop %v691
        %v693 = vmul.f32 %v661, 1.442695
        %v694 = vpow.pop %v693
        %v695 = vmul.f32 %v662, 1.442695
        %v696 = vpow.pop %v695
        %v697 = vmul.f32 %v663, 1.442695
        %v698 = vpow.pop %v697
        %v699 = vmul.f32 %v664, 1.442695
        %v700 = vpow.pop %v699
        %v701 = vmul.f32 %v665, 1.442695
        %v702 = vpow.pop %v701
        %v703 = vmul.f32 %v666, 1.442695
        %v704 = vpow.pop %v703
        %v705 = vmul.f32 %v667, 1.442695
        %v706 = vpow.pop %v705
        %v707 = vmul.f32 %v668, 1.442695
        %v708 = vpow.pop %v707
        %v709 = vmul.f32 %v669, 1.442695
        %v710 = vpow.pop %v709
        %v711 = vmul.f32 %v670, 1.442695
        %v712 = vpow.pop %v711
        %v713 = vmul.f32 %v671, 1.442695
        %v714 = vpow.pop %v713
        %v715 = vmul.f32 %v672, 1.442695
        %v716 = vpow.pop %v715
        %v717 = vmul.f32 %v673, 1.442695
        %v718 = vpow.pop %v717
        %v719 = vmul.f32 %v674, 1.442695
        %v720 = vpow.pop %v719
        %v721 = vmul.f32 %v675, 1.442695
        %v722 = vpow.pop %v721
        %v723 = vmul.f32 %v676, 1.442695
        %v724 = vpow.pop %v723
        %749 = vset.pattern.permute.xlu0 0
        %750 = vperm.xlu0 %749, %v678
        %v751 = vpop.permute.xlu0 %750
        %752 = vset.pattern.permute.xlu0 0
        %753 = vperm.xlu0 %752, %v680
        %v754 = vpop.permute.xlu0 %753
        %755 = vset.pattern.permute.xlu0 0
        %756 = vperm.xlu0 %755, %v682
        %v757 = vpop.permute.xlu0 %756
        %758 = vset.pattern.permute.xlu0 0
        %759 = vperm.xlu0 %758, %v684
        %v760 = vpop.permute.xlu0 %759
        %761 = vset.pattern.permute.xlu0 0
        %762 = vperm.xlu0 %761, %v686
        %v763 = vpop.permute.xlu0 %762
        %764 = vset.pattern.permute.xlu0 0
        %765 = vperm.xlu0 %764, %v688
        %v766 = vpop.permute.xlu0 %765
        %767 = vset.pattern.permute.xlu0 0
        %768 = vperm.xlu0 %767, %v690
        %v769 = vpop.permute.xlu0 %768
        %770 = vset.pattern.permute.xlu0 0
        %771 = vperm.xlu0 %770, %v692
        %v772 = vpop.permute.xlu0 %771
        %773 = vset.pattern.permute.xlu0 0
        %774 = vperm.xlu0 %773, %v694
        %v775 = vpop.permute.xlu0 %774
        %776 = vset.pattern.permute.xlu0 0
        %777 = vperm.xlu0 %776, %v696
        %v778 = vpop.permute.xlu0 %777
        %779 = vset.pattern.permute.xlu0 0
        %780 = vperm.xlu0 %779, %v698
        %v781 = vpop.permute.xlu0 %780
        %782 = vset.pattern.permute.xlu0 0
        %783 = vperm.xlu0 %782, %v700
        %v784 = vpop.permute.xlu0 %783
        %785 = vset.pattern.permute.xlu0 0
        %786 = vperm.xlu0 %785, %v702
        %v787 = vpop.permute.xlu0 %786
        %788 = vset.pattern.permute.xlu0 0
        %789 = vperm.xlu0 %788, %v704
        %v790 = vpop.permute.xlu0 %789
        %791 = vset.pattern.permute.xlu0 0
        %792 = vperm.xlu0 %791, %v706
        %v793 = vpop.permute.xlu0 %792
        %794 = vset.pattern.permute.xlu0 0
        %795 = vperm.xlu0 %794, %v708
        %v796 = vpop.permute.xlu0 %795
        %797 = vset.pattern.permute.xlu0 0
        %798 = vperm.xlu0 %797, %v710
        %v799 = vpop.permute.xlu0 %798
        %800 = vset.pattern.permute.xlu0 0
        %801 = vperm.xlu0 %800, %v712
        %v802 = vpop.permute.xlu0 %801
        %803 = vset.pattern.permute.xlu0 0
        %804 = vperm.xlu0 %803, %v714
        %v805 = vpop.permute.xlu0 %804
        %806 = vset.pattern.permute.xlu0 0
        %807 = vperm.xlu0 %806, %v716
        %v808 = vpop.permute.xlu0 %807
        %809 = vset.pattern.permute.xlu0 0
        %810 = vperm.xlu0 %809, %v718
        %v811 = vpop.permute.xlu0 %810
        %812 = vset.pattern.permute.xlu0 0
        %813 = vperm.xlu0 %812, %v720
        %v814 = vpop.permute.xlu0 %813
        %815 = vset.pattern.permute.xlu0 0
        %816 = vperm.xlu0 %815, %v722
        %v817 = vpop.permute.xlu0 %816
        %818 = vset.pattern.permute.xlu0 0
        %819 = vperm.xlu0 %818, %v724
        %v820 = vpop.permute.xlu0 %819
        %v821 = vlaneseq
        %v822 = vshrl.u32 %v821, 7
        %v823 = vsub.s32 %v574, %v822
        %v824 = vrot.slane %v751, %v823
        %v825 = vlaneseq
        %v826 = vshrl.u32 %v825, 7
        %v827 = vsub.s32 %v579, %v826
        %v828 = vrot.slane %v754, %v827
        %v829 = vsel %vm584, %v828, %v824
        %v830 = vlaneseq
        %v831 = vshrl.u32 %v830, 7
        %v832 = vsub.s32 %v586, %v831
        %v833 = vrot.slane %v757, %v832
        %v834 = vsel %vm591, %v833, %v829
        %v835 = vlaneseq
        %v836 = vshrl.u32 %v835, 7
        %v837 = vsub.s32 %v574, %v836
        %v838 = vrot.slane %v760, %v837
        %v839 = vlaneseq
        %v840 = vshrl.u32 %v839, 7
        %v841 = vsub.s32 %v579, %v840
        %v842 = vrot.slane %v763, %v841
        %v843 = vsel %vm584, %v842, %v838
        %v844 = vlaneseq
        %v845 = vshrl.u32 %v844, 7
        %v846 = vsub.s32 %v586, %v845
        %v847 = vrot.slane %v766, %v846
        %v848 = vsel %vm591, %v847, %v843
        %v849 = vlaneseq
        %v850 = vshrl.u32 %v849, 7
        %v851 = vsub.s32 %v574, %v850
        %v852 = vrot.slane %v769, %v851
        %v853 = vlaneseq
        %v854 = vshrl.u32 %v853, 7
        %v855 = vsub.s32 %v579, %v854
        %v856 = vrot.slane %v772, %v855
        %v857 = vsel %vm584, %v856, %v852
        %v858 = vlaneseq
        %v859 = vshrl.u32 %v858, 7
        %v860 = vsub.s32 %v586, %v859
        %v861 = vrot.slane %v775, %v860
        %v862 = vsel %vm591, %v861, %v857
        %v863 = vlaneseq
        %v864 = vshrl.u32 %v863, 7
        %v865 = vsub.s32 %v574, %v864
        %v866 = vrot.slane %v778, %v865
        %v867 = vlaneseq
        %v868 = vshrl.u32 %v867, 7
        %v869 = vsub.s32 %v579, %v868
        %v870 = vrot.slane %v781, %v869
        %v871 = vsel %vm584, %v870, %v866
        %v872 = vlaneseq
        %v873 = vshrl.u32 %v872, 7
        %v874 = vsub.s32 %v586, %v873
        %v875 = vrot.slane %v784, %v874
        %v876 = vsel %vm591, %v875, %v871
        %v877 = vlaneseq
        %v878 = vshrl.u32 %v877, 7
        %v879 = vsub.s32 %v574, %v878
        %v880 = vrot.slane %v787, %v879
        %v881 = vlaneseq
        %v882 = vshrl.u32 %v881, 7
        %v883 = vsub.s32 %v579, %v882
        %v884 = vrot.slane %v790, %v883
        %v885 = vsel %vm584, %v884, %v880
        %v886 = vlaneseq
        %v887 = vshrl.u32 %v886, 7
        %v888 = vsub.s32 %v586, %v887
        %v889 = vrot.slane %v793, %v888
        %v890 = vsel %vm591, %v889, %v885
        %v891 = vlaneseq
        %v892 = vshrl.u32 %v891, 7
        %v893 = vsub.s32 %v574, %v892
        %v894 = vrot.slane %v796, %v893
        %v895 = vlaneseq
        %v896 = vshrl.u32 %v895, 7
        %v897 = vsub.s32 %v579, %v896
        %v898 = vrot.slane %v799, %v897
        %v899 = vsel %vm584, %v898, %v894
        %v900 = vlaneseq
        %v901 = vshrl.u32 %v900, 7
        %v902 = vsub.s32 %v586, %v901
        %v903 = vrot.slane %v802, %v902
        %v904 = vsel %vm591, %v903, %v899
        %v905 = vlaneseq
        %v906 = vshrl.u32 %v905, 7
        %v907 = vsub.s32 %v574, %v906
        %v908 = vrot.slane %v805, %v907
        %v909 = vlaneseq
        %v910 = vshrl.u32 %v909, 7
        %v911 = vsub.s32 %v579, %v910
        %v912 = vrot.slane %v808, %v911
        %v913 = vsel %vm584, %v912, %v908
        %v914 = vlaneseq
        %v915 = vshrl.u32 %v914, 7
        %v916 = vsub.s32 %v586, %v915
        %v917 = vrot.slane %v811, %v916
        %v918 = vsel %vm591, %v917, %v913
        %v919 = vlaneseq
        %v920 = vshrl.u32 %v919, 7
        %v921 = vsub.s32 %v574, %v920
        %v922 = vrot.slane %v814, %v921
        %v923 = vlaneseq
        %v924 = vshrl.u32 %v923, 7
        %v925 = vsub.s32 %v579, %v924
        %v926 = vrot.slane %v817, %v925
        %v927 = vsel %vm584, %v926, %v922
        %v928 = vlaneseq
        %v929 = vshrl.u32 %v928, 7
        %v930 = vsub.s32 %v586, %v929
        %v931 = vrot.slane %v820, %v930
        %v932 = vsel %vm591, %v931, %v927
        %v933 = vsel %vm593, %v848, %v834
        %v934 = vsel %vm594, %v862, %v933
        %v935 = vsel %vm596, %v876, %v934
        %v936 = vsel %vm598, %v890, %v935
        %v937 = vsel %vm600, %v904, %v936
        %v938 = vsel %vm602, %v918, %v937
        %v939 = vsel %vm604, %v932, %v938
        %v941 = vsel %vm560, %v939, 0.0
        %v942 = vsel %vm608, %v941, 0.0
        %943 = vadd.xlane.f32.xlu0 %v942
        %v944 = vpop.xlane.xlu0 %943
        %vm945 = vcmp.gt.f32.partialorder %v944, 0.0
        %v946 = vrcp.pop %v944
        %v947 = vmul.f32 1.0, %v946
        %v948 = vsel %vm945, %v947, 0.0
        %v949 = vmul.f32 %v941, %v948
        %950 = vst.msk [vmem:[#allocation3] sm:$0xff] %vm608, %v949
        %951 = vset.pattern.permute.xlu0 1
        %952 = vperm.xlu0 %951, %v556
        %v953 = vpop.permute.xlu0 %952
        %954 = vset.pattern.permute.xlu0 1
        %955 = vperm.xlu0 %954, %v557
        %v956 = vpop.permute.xlu0 %955
        %957 = vset.pattern.permute.xlu0 1
        %958 = vperm.xlu0 %957, %v558
        %v959 = vpop.permute.xlu0 %958
        %v960 = vlaneseq
        %v961 = vshrl.u32 %v960, 7
        %v962 = vsub.s32 %v574, %v961
        %v963 = vrot.slane %v953, %v962
        %v964 = vlaneseq
        %v965 = vshrl.u32 %v964, 7
        %v966 = vsub.s32 %v579, %v965
        %v967 = vrot.slane %v956, %v966
        %v968 = vsel %vm584, %v967, %v963
        %v969 = vlaneseq
        %v970 = vshrl.u32 %v969, 7
        %v971 = vsub.s32 %v586, %v970
        %v972 = vrot.slane %v959, %v971
        %v973 = vsel %vm591, %v972, %v968
        %v974 = vsel %vm594, %v973, %v973
        %v975 = vsel %vm596, %v973, %v974
        %v976 = vsel %vm598, %v973, %v975
        %v977 = vsel %vm600, %v973, %v976
        %v978 = vsel %vm602, %v973, %v977
        %v979 = vsel %vm604, %v973, %v978
        %v981 = vsel %vm560, %v979, -inf
        %v982 = vsel %vm608, %v981, -inf
        %983 = vmax.xlane.f32.xlu0 %v982
        %v984 = vpop.xlane.xlu0 %983
        %v986 = vlaneseq
        %v987 = vshrl.u32 %v986, 7
        %v988 = vsub.s32 0, %v987
        %v989 = vrot.slane %v984, %v988
        %v990 = vlaneseq
        %v991 = vshrl.u32 %v990, 7
        %v992 = vsub.s32 1, %v991
        %v993 = vrot.slane %v984, %v992
        %v994 = vlaneseq
        %v995 = vshrl.u32 %v994, 7
        %v996 = vsub.s32 2, %v995
        %v997 = vrot.slane %v984, %v996
        %v998 = vlaneseq
        %v999 = vshrl.u32 %v998, 7
        %v1000 = vsub.s32 3, %v999
        %v1001 = vrot.slane %v984, %v1000
        %v1002 = vlaneseq
        %v1003 = vshrl.u32 %v1002, 7
        %v1004 = vsub.s32 4, %v1003
        %v1005 = vrot.slane %v984, %v1004
        %v1006 = vlaneseq
        %v1007 = vshrl.u32 %v1006, 7
        %v1008 = vsub.s32 5, %v1007
        %v1009 = vrot.slane %v984, %v1008
        %v1010 = vlaneseq
        %v1011 = vshrl.u32 %v1010, 7
        %v1012 = vsub.s32 6, %v1011
        %v1013 = vrot.slane %v984, %v1012
        %v1014 = vlaneseq
        %v1015 = vshrl.u32 %v1014, 7
        %v1016 = vsub.s32 7, %v1015
        %v1017 = vrot.slane %v984, %v1016
        %v1026 = vsub.f32 %v556, %v989
        %v1027 = vsub.f32 %v557, %v989
        %v1028 = vsub.f32 %v558, %v989
        %v1029 = vsub.f32 %v556, %v993
        %v1030 = vsub.f32 %v557, %v993
        %v1031 = vsub.f32 %v558, %v993
        %v1032 = vsub.f32 %v556, %v997
        %v1033 = vsub.f32 %v557, %v997
        %v1034 = vsub.f32 %v558, %v997
        %v1035 = vsub.f32 %v556, %v1001
        %v1036 = vsub.f32 %v557, %v1001
        %v1037 = vsub.f32 %v558, %v1001
        %v1038 = vsub.f32 %v556, %v1005
        %v1039 = vsub.f32 %v557, %v1005
        %v1040 = vsub.f32 %v558, %v1005
        %v1041 = vsub.f32 %v556, %v1009
        %v1042 = vsub.f32 %v557, %v1009
        %v1043 = vsub.f32 %v558, %v1009
        %v1044 = vsub.f32 %v556, %v1013
        %v1045 = vsub.f32 %v557, %v1013
        %v1046 = vsub.f32 %v558, %v1013
        %v1047 = vsub.f32 %v556, %v1017
        %v1048 = vsub.f32 %v557, %v1017
        %v1049 = vsub.f32 %v558, %v1017
        %v1050 = vmul.f32 %v1026, 1.442695
        %v1051 = vpow.pop %v1050
        %v1052 = vmul.f32 %v1027, 1.442695
        %v1053 = vpow.pop %v1052
        %v1054 = vmul.f32 %v1028, 1.442695
        %v1055 = vpow.pop %v1054
        %v1056 = vmul.f32 %v1029, 1.442695
        %v1057 = vpow.pop %v1056
        %v1058 = vmul.f32 %v1030, 1.442695
        %v1059 = vpow.pop %v1058
        %v1060 = vmul.f32 %v1031, 1.442695
        %v1061 = vpow.pop %v1060
        %v1062 = vmul.f32 %v1032, 1.442695
        %v1063 = vpow.pop %v1062
        %v1064 = vmul.f32 %v1033, 1.442695
        %v1065 = vpow.pop %v1064
        %v1066 = vmul.f32 %v1034, 1.442695
        %v1067 = vpow.pop %v1066
        %v1068 = vmul.f32 %v1035, 1.442695
        %v1069 = vpow.pop %v1068
        %v1070 = vmul.f32 %v1036, 1.442695
        %v1071 = vpow.pop %v1070
        %v1072 = vmul.f32 %v1037, 1.442695
        %v1073 = vpow.pop %v1072
        %v1074 = vmul.f32 %v1038, 1.442695
        %v1075 = vpow.pop %v1074
        %v1076 = vmul.f32 %v1039, 1.442695
        %v1077 = vpow.pop %v1076
        %v1078 = vmul.f32 %v1040, 1.442695
        %v1079 = vpow.pop %v1078
        %v1080 = vmul.f32 %v1041, 1.442695
        %v1081 = vpow.pop %v1080
        %v1082 = vmul.f32 %v1042, 1.442695
        %v1083 = vpow.pop %v1082
        %v1084 = vmul.f32 %v1043, 1.442695
        %v1085 = vpow.pop %v1084
        %v1086 = vmul.f32 %v1044, 1.442695
        %v1087 = vpow.pop %v1086
        %v1088 = vmul.f32 %v1045, 1.442695
        %v1089 = vpow.pop %v1088
        %v1090 = vmul.f32 %v1046, 1.442695
        %v1091 = vpow.pop %v1090
        %v1092 = vmul.f32 %v1047, 1.442695
        %v1093 = vpow.pop %v1092
        %v1094 = vmul.f32 %v1048, 1.442695
        %v1095 = vpow.pop %v1094
        %v1096 = vmul.f32 %v1049, 1.442695
        %v1097 = vpow.pop %v1096
        %1122 = vset.pattern.permute.xlu0 1
        %1123 = vperm.xlu0 %1122, %v1051
        %v1124 = vpop.permute.xlu0 %1123
        %1125 = vset.pattern.permute.xlu0 1
        %1126 = vperm.xlu0 %1125, %v1053
        %v1127 = vpop.permute.xlu0 %1126
        %1128 = vset.pattern.permute.xlu0 1
        %1129 = vperm.xlu0 %1128, %v1055
        %v1130 = vpop.permute.xlu0 %1129
        %1131 = vset.pattern.permute.xlu0 1
        %1132 = vperm.xlu0 %1131, %v1057
        %v1133 = vpop.permute.xlu0 %1132
        %1134 = vset.pattern.permute.xlu0 1
        %1135 = vperm.xlu0 %1134, %v1059
        %v1136 = vpop.permute.xlu0 %1135
        %1137 = vset.pattern.permute.xlu0 1
        %1138 = vperm.xlu0 %1137, %v1061
        %v1139 = vpop.permute.xlu0 %1138
        %1140 = vset.pattern.permute.xlu0 1
        %1141 = vperm.xlu0 %1140, %v1063
        %v1142 = vpop.permute.xlu0 %1141
        %1143 = vset.pattern.permute.xlu0 1
        %1144 = vperm.xlu0 %1143, %v1065
        %v1145 = vpop.permute.xlu0 %1144
        %1146 = vset.pattern.permute.xlu0 1
        %1147 = vperm.xlu0 %1146, %v1067
        %v1148 = vpop.permute.xlu0 %1147
        %1149 = vset.pattern.permute.xlu0 1
        %1150 = vperm.xlu0 %1149, %v1069
        %v1151 = vpop.permute.xlu0 %1150
        %1152 = vset.pattern.permute.xlu0 1
        %1153 = vperm.xlu0 %1152, %v1071
        %v1154 = vpop.permute.xlu0 %1153
        %1155 = vset.pattern.permute.xlu0 1
        %1156 = vperm.xlu0 %1155, %v1073
        %v1157 = vpop.permute.xlu0 %1156
        %1158 = vset.pattern.permute.xlu0 1
        %1159 = vperm.xlu0 %1158, %v1075
        %v1160 = vpop.permute.xlu0 %1159
        %1161 = vset.pattern.permute.xlu0 1
        %1162 = vperm.xlu0 %1161, %v1077
        %v1163 = vpop.permute.xlu0 %1162
        %1164 = vset.pattern.permute.xlu0 1
        %1165 = vperm.xlu0 %1164, %v1079
        %v1166 = vpop.permute.xlu0 %1165
        %1167 = vset.pattern.permute.xlu0 1
        %1168 = vperm.xlu0 %1167, %v1081
        %v1169 = vpop.permute.xlu0 %1168
        %1170 = vset.pattern.permute.xlu0 1
        %1171 = vperm.xlu0 %1170, %v1083
        %v1172 = vpop.permute.xlu0 %1171
        %1173 = vset.pattern.permute.xlu0 1
        %1174 = vperm.xlu0 %1173, %v1085
        %v1175 = vpop.permute.xlu0 %1174
        %1176 = vset.pattern.permute.xlu0 1
        %1177 = vperm.xlu0 %1176, %v1087
        %v1178 = vpop.permute.xlu0 %1177
        %1179 = vset.pattern.permute.xlu0 1
        %1180 = vperm.xlu0 %1179, %v1089
        %v1181 = vpop.permute.xlu0 %1180
        %1182 = vset.pattern.permute.xlu0 1
        %1183 = vperm.xlu0 %1182, %v1091
        %v1184 = vpop.permute.xlu0 %1183
        %1185 = vset.pattern.permute.xlu0 1
        %1186 = vperm.xlu0 %1185, %v1093
        %v1187 = vpop.permute.xlu0 %1186
        %1188 = vset.pattern.permute.xlu0 1
        %1189 = vperm.xlu0 %1188, %v1095
        %v1190 = vpop.permute.xlu0 %1189
        %1191 = vset.pattern.permute.xlu0 1
        %1192 = vperm.xlu0 %1191, %v1097
        %v1193 = vpop.permute.xlu0 %1192
        %v1194 = vlaneseq
        %v1195 = vshrl.u32 %v1194, 7
        %v1196 = vsub.s32 %v574, %v1195
        %v1197 = vrot.slane %v1124, %v1196
        %v1198 = vlaneseq
        %v1199 = vshrl.u32 %v1198, 7
        %v1200 = vsub.s32 %v579, %v1199
        %v1201 = vrot.slane %v1127, %v1200
        %v1202 = vsel %vm584, %v1201, %v1197
        %v1203 = vlaneseq
        %v1204 = vshrl.u32 %v1203, 7
        %v1205 = vsub.s32 %v586, %v1204
        %v1206 = vrot.slane %v1130, %v1205
        %v1207 = vsel %vm591, %v1206, %v1202
        %v1208 = vlaneseq
        %v1209 = vshrl.u32 %v1208, 7
        %v1210 = vsub.s32 %v574, %v1209
        %v1211 = vrot.slane %v1133, %v1210
        %v1212 = vlaneseq
        %v1213 = vshrl.u32 %v1212, 7
        %v1214 = vsub.s32 %v579, %v1213
        %v1215 = vrot.slane %v1136, %v1214
        %v1216 = vsel %vm584, %v1215, %v1211
        %v1217 = vlaneseq
        %v1218 = vshrl.u32 %v1217, 7
        %v1219 = vsub.s32 %v586, %v1218
        %v1220 = vrot.slane %v1139, %v1219
        %v1221 = vsel %vm591, %v1220, %v1216
        %v1222 = vlaneseq
        %v1223 = vshrl.u32 %v1222, 7
        %v1224 = vsub.s32 %v574, %v1223
        %v1225 = vrot.slane %v1142, %v1224
        %v1226 = vlaneseq
        %v1227 = vshrl.u32 %v1226, 7
        %v1228 = vsub.s32 %v579, %v1227
        %v1229 = vrot.slane %v1145, %v1228
        %v1230 = vsel %vm584, %v1229, %v1225
        %v1231 = vlaneseq
        %v1232 = vshrl.u32 %v1231, 7
        %v1233 = vsub.s32 %v586, %v1232
        %v1234 = vrot.slane %v1148, %v1233
        %v1235 = vsel %vm591, %v1234, %v1230
        %v1236 = vlaneseq
        %v1237 = vshrl.u32 %v1236, 7
        %v1238 = vsub.s32 %v574, %v1237
        %v1239 = vrot.slane %v1151, %v1238
        %v1240 = vlaneseq
        %v1241 = vshrl.u32 %v1240, 7
        %v1242 = vsub.s32 %v579, %v1241
        %v1243 = vrot.slane %v1154, %v1242
        %v1244 = vsel %vm584, %v1243, %v1239
        %v1245 = vlaneseq
        %v1246 = vshrl.u32 %v1245, 7
        %v1247 = vsub.s32 %v586, %v1246
        %v1248 = vrot.slane %v1157, %v1247
        %v1249 = vsel %vm591, %v1248, %v1244
        %v1250 = vlaneseq
        %v1251 = vshrl.u32 %v1250, 7
        %v1252 = vsub.s32 %v574, %v1251
        %v1253 = vrot.slane %v1160, %v1252
        %v1254 = vlaneseq
        %v1255 = vshrl.u32 %v1254, 7
        %v1256 = vsub.s32 %v579, %v1255
        %v1257 = vrot.slane %v1163, %v1256
        %v1258 = vsel %vm584, %v1257, %v1253
        %v1259 = vlaneseq
        %v1260 = vshrl.u32 %v1259, 7
        %v1261 = vsub.s32 %v586, %v1260
        %v1262 = vrot.slane %v1166, %v1261
        %v1263 = vsel %vm591, %v1262, %v1258
        %v1264 = vlaneseq
        %v1265 = vshrl.u32 %v1264, 7
        %v1266 = vsub.s32 %v574, %v1265
        %v1267 = vrot.slane %v1169, %v1266
        %v1268 = vlaneseq
        %v1269 = vshrl.u32 %v1268, 7
        %v1270 = vsub.s32 %v579, %v1269
        %v1271 = vrot.slane %v1172, %v1270
        %v1272 = vsel %vm584, %v1271, %v1267
        %v1273 = vlaneseq
        %v1274 = vshrl.u32 %v1273, 7
        %v1275 = vsub.s32 %v586, %v1274
        %v1276 = vrot.slane %v1175, %v1275
        %v1277 = vsel %vm591, %v1276, %v1272
        %v1278 = vlaneseq
        %v1279 = vshrl.u32 %v1278, 7
        %v1280 = vsub.s32 %v574, %v1279
        %v1281 = vrot.slane %v1178, %v1280
        %v1282 = vlaneseq
        %v1283 = vshrl.u32 %v1282, 7
        %v1284 = vsub.s32 %v579, %v1283
        %v1285 = vrot.slane %v1181, %v1284
        %v1286 = vsel %vm584, %v1285, %v1281
        %v1287 = vlaneseq
        %v1288 = vshrl.u32 %v1287, 7
        %v1289 = vsub.s32 %v586, %v1288
        %v1290 = vrot.slane %v1184, %v1289
        %v1291 = vsel %vm591, %v1290, %v1286
        %v1292 = vlaneseq
        %v1293 = vshrl.u32 %v1292, 7
        %v1294 = vsub.s32 %v574, %v1293
        %v1295 = vrot.slane %v1187, %v1294
        %v1296 = vlaneseq
        %v1297 = vshrl.u32 %v1296, 7
        %v1298 = vsub.s32 %v579, %v1297
        %v1299 = vrot.slane %v1190, %v1298
        %v1300 = vsel %vm584, %v1299, %v1295
        %v1301 = vlaneseq
        %v1302 = vshrl.u32 %v1301, 7
        %v1303 = vsub.s32 %v586, %v1302
        %v1304 = vrot.slane %v1193, %v1303
        %v1305 = vsel %vm591, %v1304, %v1300
        %v1306 = vsel %vm593, %v1221, %v1207
        %v1307 = vsel %vm594, %v1235, %v1306
        %v1308 = vsel %vm596, %v1249, %v1307
        %v1309 = vsel %vm598, %v1263, %v1308
        %v1310 = vsel %vm600, %v1277, %v1309
        %v1311 = vsel %vm602, %v1291, %v1310
        %v1312 = vsel %vm604, %v1305, %v1311
        %v1314 = vsel %vm560, %v1312, 0.0
        %v1315 = vsel %vm608, %v1314, 0.0
        %1316 = vadd.xlane.f32.xlu0 %v1315
        %v1317 = vpop.xlane.xlu0 %1316
        %vm1318 = vcmp.gt.f32.partialorder %v1317, 0.0
        %v1319 = vrcp.pop %v1317
        %v1320 = vmul.f32 1.0, %v1319
        %v1321 = vsel %vm1318, %v1320, 0.0
        %v1322 = vmul.f32 %v1314, %v1321
        %1323 = vst.msk [vmem:[#allocation3 + $0x8] sm:$0xff] %vm608, %v1322
        %v1324 = vld [vmem:[#allocation2] sm:$0xff]
        %v1325 = vld [vmem:[#allocation2 + $0x8] sm:$0xff]
        %v1326 = vld [vmem:[#allocation2 + $0x10] sm:$0xff]
        %v1327 = vld [vmem:[#allocation3] sm:$0xff]
        %v1328 = vld [vmem:[#allocation3 + $0x8] sm:$0xff]
        %1332 = vrot.lane.b32.xlu0 %v1324, 96
        %v1333 = vpop.permute.xlu0 %1332
        %1334 = vrot.lane.b32.xlu0 %v1325, 96
        %v1335 = vpop.permute.xlu0 %1334
        %1336 = vrot.lane.b32.xlu0 %v1326, 96
        %v1337 = vpop.permute.xlu0 %1336
        %v1342 = vsel %vm608, %v1327, 0
        %v1345 = vsel %vm608, %v1328, 0
        %1347 = vmatprep.subr.mxu0 0.0
        %1348 = vmatpush1.msra.mxu0 %v1333
        %1349 = vmatprep.subr.mxu0 0.0
        %1350 = vmatpush1.msra.mxu0 %v1335
        %1351 = vmatprep.subr.mxu0 0.0
        %1352 = vmatpush1.msra.mxu0 %v1337
        %1353 = vmatprep.subr.mxu0 0.0
        %1354 = vmatpush1.msra.mxu0 0.0
        %1355 = vmatprep.subr.mxu0 0.0
        %1356 = vmatpush1.msra.mxu0 0.0
        %1357 = vmatprep.subr.mxu0 0.0
        %1358 = vmatpush1.msra.mxu0 0.0
        %1359 = vmatprep.subr.mxu0 0.0
        %1360 = vmatpush1.msra.mxu0 0.0
        %1361 = vmatprep.subr.mxu0 0.0
        %1362 = vmatpush1.msra.mxu0 0.0
        %1363 = vmatprep.subr.mxu0 0.0
        %1364 = vmatpush1.msra.mxu0 0.0
        %1365 = vmatprep.subr.mxu0 0.0
        %1366 = vmatpush1.msra.mxu0 0.0
        %1367 = vmatprep.subr.mxu0 0.0
        %1368 = vmatpush1.msra.mxu0 0.0
        %1369 = vmatprep.subr.mxu0 0.0
        %1370 = vmatpush1.msra.mxu0 0.0
        %1371 = vmatprep.subr.mxu0 0.0
        %1372 = vmatpush1.msra.mxu0 0.0
        %1373 = vmatprep.subr.mxu0 0.0
        %1374 = vmatpush1.msra.mxu0 0.0
        %1375 = vmatprep.subr.mxu0 0.0
        %1376 = vmatpush1.msra.mxu0 0.0
        %1377 = vmatprep.subr.mxu0 0.0
        %1378 = vmatpush1.msra.mxu0 0.0
        %1379 = vmatprep.subr.mxu0 0.0
        %1380 = vmatpush1.msra.mxu0 0.0
        %1381 = vmatprep.subr.mxu0 0.0
        %1382 = vmatpush1.msra.mxu0 0.0
        %1383 = vmatprep.subr.mxu0 0.0
        %1384 = vmatpush1.msra.mxu0 0.0
        %1385 = vmatprep.subr.mxu0 0.0
        %1386 = vmatpush1.msra.mxu0 0.0
        %1387 = vmatprep.subr.mxu0 0.0
        %1388 = vmatpush1.msra.mxu0 0.0
        %1389 = vmatprep.subr.mxu0 0.0
        %1390 = vmatpush1.msra.mxu0 0.0
        %1391 = vmatprep.subr.mxu0 0.0
        %1392 = vmatpush1.msra.mxu0 0.0
        %1393 = vmatprep.subr.mxu0 0.0
        %1394 = vmatpush1.msra.mxu0 0.0
        %1395 = vmatprep.subr.mxu0 0.0
        %1396 = vmatpush1.msra.mxu0 0.0
        %1397 = vmatprep.subr.mxu0 0.0
        %1398 = vmatpush1.msra.mxu0 0.0
        %1399 = vmatprep.subr.mxu0 0.0
        %1400 = vmatpush1.msra.mxu0 0.0
        %1401 = vmatprep.subr.mxu0 0.0
        %1402 = vmatpush1.msra.mxu0 0.0
        %1403 = vmatprep.subr.mxu0 0.0
        %1404 = vmatpush1.msra.mxu0 0.0
        %1405 = vmatprep.subr.mxu0 0.0
        %1406 = vmatpush1.msra.mxu0 0.0
        %1407 = vmatprep.subr.mxu0 0.0
        %1408 = vmatpush1.msra.mxu0 0.0
        %1409 = vmatprep.subr.mxu0 0.0
        %1410 = vmatpush1.msra.mxu0 0.0
        %1411 = vmatprep.mubr.f32.mxu0 0.0
        %1412 = vmatmul.mubr.f32.gmra.mrb[0].mxu0 %v1342
        %v1413 = vpop.f32.mrb[0].mxu0
        %v1414 = vadd.f32 0.0, %v1413
        %v1415 = vpop.f32.mrb[0].mxu0
        %1416 = vmatprep.mubr.f32.mxu0 0.0
        %1417 = vmatmul.mubr.f32.gmra.mrb[0].mxu0 %v1345
        %v1418 = vpop.f32.mrb[0].mxu0
        %v1419 = vadd.f32 0.0, %v1418
        %v1420 = vpop.f32.mrb[0].mxu0
        %1421 = vdwg.mxu0
        %1422 = vst.msk [vmem:[%s267] sm:$0xff] %vm413, %v1414
        %1424 = vrot.lane.b32.xlu0 %v1419, 32
        %v1425 = vpop.permute.xlu0 %1424
        %vm1427 = vcmask 523520
        %1428 = vst.msk [vmem:[%s267] sm:$0xff] %vm1427, %v1425
        %s1429 = sand.u32 %s157, 1
        %s1430 = scalar_lea.sflag [#allocation5], %s1429
        %s1431 = sand.u32 %s157, 1
        %s1432 = smul.addr %s1431, 8
        %s1433 = scalar_lea.vmem [#allocation4], %s1432
        // Predicated region
        $region41: #{tpu_custom_call.1} parent=39 // pred_check
          %p1434 = pneg %p167
        $region42: #{tpu_custom_call.1} parent=39 // pred_check_branch
          %1436 = sbr.rel (%p1434) target = $region44
        $region43: #{tpu_custom_call.1} parent=39 // pred_region
          %s1438 = ssub.s32 128, 128
          %1439 = vsyncadd %s1430, %s1438
          %s1440 = smul.addr %s19, 128
          %s1441 = scalar_lea.hbm %s5, %s1440
          %s1443 = sshll.u32 %s1433, 4
          %s1444 = int_to_ptr.vmem [resolvable:$true] %s1443
          %1446 = dma.vmem_to_hbm [thread:$0]  %s1444, 128, %s1441, %s1430
        $region44: #{tpu_custom_call.1} parent=39 // pred_fallthru
          _
      $region40: #{tpu_custom_call.1} parent=5 // pred_fallthru
        _
      %p1447 = scmp.le.s32.totalorder 2, %s14
      // Predicated region
      $region45: #{tpu_custom_call.1} parent=5 // pred_check
        %p1448 = pneg %p1447
      $region46: #{tpu_custom_call.1} parent=5 // pred_check_branch
        %1450 = sbr.rel (%p1448) target = $region48
      $region47: #{tpu_custom_call.1} parent=5 // pred_region
        %s1451 = ssub.s32 %s14, 2
        // Predicated region
        $region49: #{tpu_custom_call.1} parent=47 // pred_check
          %p1452 = pneg %p173
        $region50: #{tpu_custom_call.1} parent=47 // pred_check_branch
          %1454 = sbr.rel (%p1452) target = $region52
        $region51: #{tpu_custom_call.1} parent=47 // pred_region
          %s1455 = sand.u32 %s158, 1
          %s1456 = scalar_lea.sflag [#allocation5], %s1455
          %s1457 = sand.u32 %s158, 1
          %s1458 = smul.addr %s1457, 8
          %s1459 = scalar_lea.vmem [#allocation4], %s1458
          %1460 = dma.done %s1456, 128
        $region52: #{tpu_custom_call.1} parent=47 // pred_fallthru
          _
      $region48: #{tpu_custom_call.1} parent=5 // pred_fallthru
        _
    $region6: #{tpu_custom_call.1} parent=1 // loop_footer
      %s18 = sadd.s32 1, %s14
    $region7: #{tpu_custom_call.1} parent=1 // loop_footer_branch
      %13 = sbr.rel target = $region3
    $region8: #{tpu_custom_call.1} parent=1 // loop_exit
      _
    %1461 = vsyncpa [#allocation5], 1
    %s1462 = scalar_lea.sflag [#allocation5], 1
    %1463 = vsyncpa %s1462, 1

</llo_original>
